<compile_context>
chip_gen: v7x
topology: tpu7x:2x2x1
jax: 0.10.0
libtpu: 0.0.40
codegen_flags: <defaults>
</compile_context>

<pallas_src>
import functools

import jax
import jax.numpy as jnp
import numpy as np
from jax.experimental import pallas as pl
from jax.experimental.pallas import tpu as pltpu


def _point_refine_kernel(H, W, bidx_ref, loc_ref, fp_ref, b1_ref, w2t_ref,
                         b2_ref, out_ref):
    """One (sample, P-tile) grid step.

    loc_ref : (1, 2, TP)       f32   pixel coords, row0 = y, row1 = x
    fp_ref  : (1, hidden, H*W) bf16  w1^T-projected feature map of this sample
    b1_ref  : (hidden, 1)      f32
    w2t_ref : (2, hidden)      bf16
    b2_ref  : (2, 1)           f32
    out_ref : (1, 2, TP)       f32
    """
    del bidx_ref  # consumed by fp_ref's index_map (scalar prefetch)

    loc = loc_ref[0]                              # (2, TP) f32
    TP = loc.shape[1]
    y = loc[0:1, :]                               # (1, TP)
    x = loc[1:2, :]                               # (1, TP)

    # Normalize to [-1, 1] exactly like the PyTorch module, then unnormalize
    # with align_corners=False (F.grid_sample default).  Assumes H, W > 1.
    iy = ((2.0 * y / (H - 1) - 1.0 + 1.0) * H - 1.0) * 0.5   # (1, TP)
    ix = ((2.0 * x / (W - 1) - 1.0 + 1.0) * W - 1.0) * 0.5   # (1, TP)

    # Separable bilinear "hat" weights (small (H,TP)/(W,TP) builds, f32 VALU):
    #   wy[h, p] = relu(1 - |h - iy[p]|),  wx[w, p] = relu(1 - |w - ix[p]|)
    # w_samp[h*W + w, p] = wy[h, p] * wx[w, p] reproduces bilinear sampling
    # with padding_mode='zeros' (out-of-range corners get zero weight).
    hy = jax.lax.broadcasted_iota(jnp.int32, (H, TP), 0).astype(jnp.float32)
    wxi = jax.lax.broadcasted_iota(jnp.int32, (W, TP), 0).astype(jnp.float32)
    wy = jnp.maximum(1.0 - jnp.abs(hy - iy), 0.0)            # (H, TP)
    wx = jnp.maximum(1.0 - jnp.abs(wxi - ix), 0.0)           # (W, TP)
    # Single outer-product multiply; W is a multiple of 8 so the reshape is a
    # layout-preserving sublane merge (no relayout copy).
    w_samp = (wy[:, None, :] * wx[None, :, :]).reshape(H * W, TP)
    w_samp = w_samp.astype(jnp.bfloat16)                     # (H*W, TP)

    # First Linear pre-fused into the feature map => full-M / full-K matmul.
    fp = fp_ref[0]                                           # (hidden, H*W) bf16
    hmid = jnp.dot(fp, w_samp,
                   preferred_element_type=jnp.float32) + b1_ref[...]
    hmid = jnp.maximum(hmid, 0.0)                            # (hidden, TP) f32

    out = jnp.dot(w2t_ref[...], hmid.astype(jnp.bfloat16),
                  preferred_element_type=jnp.float32) + b2_ref[...]
    out_ref[0] = out.astype(out_ref.dtype)                   # (2, TP) lane-dense


def point_refine(f, locations, batch_indexs, w1, b1, w2, b2, *, lane_tile=384):
    """f: (B, C, H, W); locations: (N, P, 2) (y, x); batch_indexs: (N,) int32."""
    B, C, H, W = f.shape
    N, P, _ = locations.shape
    hidden = w1.shape[1]
    out_dim = w2.shape[1]

    # Pad P up to a multiple of 128 (lane-dense rows / unmasked stores) and pick
    # a lane tile dividing it (finer parallel grid => better v7x megacore split).
    P_pad = ((P + 127) // 128) * 128
    TP = P_pad
    for cand in (lane_tile, 256, 512, 128):
        if cand <= P_pad and P_pad % cand == 0:
            TP = cand
            break
    KP = P_pad // TP

    # Fuse the first Linear into the feature map in XLA (f32 math, bf16 feed).
    f_flat = f.reshape(B, C, H * W).astype(jnp.float32)
    f_proj = jnp.einsum("ch,bcs->bhs", w1.astype(jnp.float32), f_flat,
                        precision=jax.lax.Precision.HIGHEST)
    f_proj = f_proj.astype(jnp.bfloat16)                      # (B, hidden, H*W)

    loc_t = jnp.transpose(locations, (0, 2, 1)).astype(jnp.float32)  # (N, 2, P)
    loc_t = jnp.pad(loc_t, ((0, 0), (0, 0), (0, P_pad - P)))         # (N, 2, P_pad)

    w2t = jnp.transpose(w2, (1, 0)).astype(jnp.bfloat16)      # (out_dim, hidden)
    b1c = b1.reshape(hidden, 1).astype(jnp.float32)
    b2c = b2.reshape(out_dim, 1).astype(jnp.float32)

    grid_spec = pltpu.PrefetchScalarGridSpec(
        num_scalar_prefetch=1,
        # Sample axis outermost so the data-dependent f_proj block index is
        # constant across the inner P-tile steps (no redundant re-fetch).
        grid=(N, KP),
        in_specs=[
            pl.BlockSpec((1, 2, TP), lambda i, j, bi: (i, 0, j)),
            # data-dependent block index: pick feature map batch_indexs[i]
            pl.BlockSpec((1, hidden, H * W), lambda i, j, bi: (bi[i], 0, 0)),
            pl.BlockSpec((hidden, 1), lambda i, j, bi: (0, 0)),
            pl.BlockSpec((out_dim, hidden), lambda i, j, bi: (0, 0)),
            pl.BlockSpec((out_dim, 1), lambda i, j, bi: (0, 0)),
        ],
        out_specs=pl.BlockSpec((1, out_dim, TP), lambda i, j, bi: (i, 0, j)),
    )

    out_t = pl.pallas_call(
        functools.partial(_point_refine_kernel, H, W),
        out_shape=jax.ShapeDtypeStruct((N, out_dim, P_pad), jnp.float32),
        grid_spec=grid_spec,
        compiler_params=pltpu.CompilerParams(
            dimension_semantics=("parallel", "parallel")),
    )(batch_indexs, loc_t, f_proj, b1c, w2t, b2c)

    return jnp.transpose(out_t[:, :, :P], (0, 2, 1))          # (N, P, 2)


def point_refine_reference(f, locations, batch_indexs, w1, b1, w2, b2):
    """Pure-JAX reference mirroring the PyTorch forward (f32 throughout)."""
    B, C, H, W = f.shape
    new_f = f[batch_indexs]                       # (N, C, H, W)
    y = locations[..., 0]
    x = locations[..., 1]
    gy = 2.0 * y / (H - 1) - 1.0
    gx = 2.0 * x / (W - 1) - 1.0
    iy = ((gy + 1.0) * H - 1.0) * 0.5
    ix = ((gx + 1.0) * W - 1.0) * 0.5
    y0 = jnp.floor(iy)
    x0 = jnp.floor(ix)
    fy = iy - y0
    fx = ix - x0

    def sample_one(img, y0i, x0i, fyv, fxv):
        def get(yi, xi):
            valid = (yi >= 0) & (yi < H) & (xi >= 0) & (xi < W)
            yic = jnp.clip(yi, 0, H - 1)
            xic = jnp.clip(xi, 0, W - 1)
            v = img[:, yic, xic]                  # (C, P)
            return v * valid.astype(img.dtype)[None, :]
        v00 = get(y0i, x0i)
        v01 = get(y0i, x0i + 1)
        v10 = get(y0i + 1, x0i)
        v11 = get(y0i + 1, x0i + 1)
        return (v00 * (1 - fyv) * (1 - fxv) + v01 * (1 - fyv) * fxv
                + v10 * fyv * (1 - fxv) + v11 * fyv * fxv)    # (C, P)

    sampled = jax.vmap(sample_one)(new_f, y0.astype(jnp.int32),
                                   x0.astype(jnp.int32), fy, fx)  # (N, C, P)
    sampled_t = jnp.transpose(sampled, (0, 2, 1))                 # (N, P, C)
    hmid = jnp.maximum(
        jnp.dot(sampled_t, w1, precision=jax.lax.Precision.HIGHEST) + b1, 0.0)
    return jnp.dot(hmid, w2, precision=jax.lax.Precision.HIGHEST) + b2


if __name__ == "__main__":
    B, C, H, W = 2, 4, 16, 16
    N, P = 3, 729

    key = jax.random.PRNGKey(0)
    k_f, k_loc, k_bi, k_w1, k_b1, k_w2, k_b2 = jax.random.split(key, 7)

    f = jax.random.normal(k_f, (B, C, H, W), dtype=jnp.float32)
    # (y, x) pixel coords; a few points land out of bounds to exercise zero padding
    locations = jax.random.uniform(k_loc, (N, P, 2), dtype=jnp.float32,
                                   minval=-1.0, maxval=float(H))
    batch_indexs = jax.random.randint(k_bi, (N,), 0, B, dtype=jnp.int32)

    # Synthetic MLP params (Linear(C,256) -> ReLU -> Linear(256,2)),
    # stored as (in, out) so the math is x @ W + b.
    w1 = 0.1 * jax.random.normal(k_w1, (C, 256), dtype=jnp.float32)
    b1 = 0.1 * jax.random.normal(k_b1, (256,), dtype=jnp.float32)
    w2 = 0.1 * jax.random.normal(k_w2, (256, 2), dtype=jnp.float32)
    b2 = 0.1 * jax.random.normal(k_b2, (2,), dtype=jnp.float32)

    out = point_refine(f, locations, batch_indexs, w1, b1, w2, b2)
    out = jax.block_until_ready(out)

    ref = point_refine_reference(f, locations, batch_indexs, w1, b1, w2, b2)
    np.testing.assert_allclose(np.asarray(out), np.asarray(ref),
                               rtol=2e-2, atol=3e-2)

    print("KERNEL_OK")
</pallas_src>

<mosaic_0001>
module attributes {stable_mosaic.version = 11 : i64} {
  func.func @_point_refine_kernel(%arg0: i32, %arg1: i32, %arg2: memref<3xi32, #tpu.memory_space<smem>>, %arg3: memref<1x2x384xf32, #tpu.memory_space<vmem>>, %arg4: memref<1x256x256xbf16, #tpu.memory_space<vmem>>, %arg5: memref<256x1xf32, #tpu.memory_space<vmem>>, %arg6: memref<2x256xbf16, #tpu.memory_space<vmem>>, %arg7: memref<2x1xf32, #tpu.memory_space<vmem>>, %arg8: memref<1x2x384xf32, #tpu.memory_space<vmem>>) attributes {dimension_semantics = [#tpu.dimension_semantics<parallel>, #tpu.dimension_semantics<parallel>], iteration_bounds = array<i64: 3, 2>, scalar_prefetch = 1 : i64, scratch_operands = 0 : i64, tpu.core_type = #tpu.core_type<tc>, window_params = [{transform_indices = @transform_0, window_bounds = array<i64: 1, 2, 384>}, {transform_indices = @transform_1, window_bounds = array<i64: 1, 256, 256>}, {pipeline_mode = #tpu.pipeline_mode<synchronous>, transform_indices = @transform_2, window_bounds = array<i64: 256, 1>}, {pipeline_mode = #tpu.pipeline_mode<synchronous>, transform_indices = @transform_3, window_bounds = array<i64: 2, 256>}, {pipeline_mode = #tpu.pipeline_mode<synchronous>, transform_indices = @transform_4, window_bounds = array<i64: 2, 1>}, {transform_indices = @transform_5, window_bounds = array<i64: 1, 2, 384>}]} {
    %c0 = arith.constant 0 : index
    %c0_0 = arith.constant 0 : index
    %c0_1 = arith.constant 0 : index
    %0 = vector.load %arg3[%c0, %c0_0, %c0_1] : memref<1x2x384xf32, #tpu.memory_space<vmem>>, vector<1x2x384xf32>
    %1 = vector.shape_cast %0 : vector<1x2x384xf32> to vector<2x384xf32>
    %2 = vector.extract_strided_slice %1 {offsets = [0, 0], sizes = [1, 384], strides = [1, 1]} : vector<2x384xf32> to vector<1x384xf32>
    %3 = vector.extract_strided_slice %1 {offsets = [1, 0], sizes = [1, 384], strides = [1, 1]} : vector<2x384xf32> to vector<1x384xf32>
    %cst = arith.constant 2.000000e+00 : f32
    %4 = vector.broadcast %cst : f32 to vector<1x384xf32>
    %5 = arith.mulf %4, %2 : vector<1x384xf32>
    %cst_2 = arith.constant 1.500000e+01 : f32
    %6 = vector.broadcast %cst_2 : f32 to vector<1x384xf32>
    %7 = arith.divf %5, %6 : vector<1x384xf32>
    %cst_3 = arith.constant 1.000000e+00 : f32
    %8 = vector.broadcast %cst_3 : f32 to vector<1x384xf32>
    %9 = arith.subf %7, %8 : vector<1x384xf32>
    %cst_4 = arith.constant 1.000000e+00 : f32
    %10 = vector.broadcast %cst_4 : f32 to vector<1x384xf32>
    %11 = arith.addf %9, %10 : vector<1x384xf32>
    %cst_5 = arith.constant 1.600000e+01 : f32
    %12 = vector.broadcast %cst_5 : f32 to vector<1x384xf32>
    %13 = arith.mulf %11, %12 : vector<1x384xf32>
    %cst_6 = arith.constant 1.000000e+00 : f32
    %14 = vector.broadcast %cst_6 : f32 to vector<1x384xf32>
    %15 = arith.subf %13, %14 : vector<1x384xf32>
    %cst_7 = arith.constant 5.000000e-01 : f32
    %16 = vector.broadcast %cst_7 : f32 to vector<1x384xf32>
    %17 = arith.mulf %15, %16 : vector<1x384xf32>
    %cst_8 = arith.constant 2.000000e+00 : f32
    %18 = vector.broadcast %cst_8 : f32 to vector<1x384xf32>
    %19 = arith.mulf %18, %3 : vector<1x384xf32>
    %cst_9 = arith.constant 1.500000e+01 : f32
    %20 = vector.broadcast %cst_9 : f32 to vector<1x384xf32>
    %21 = arith.divf %19, %20 : vector<1x384xf32>
    %cst_10 = arith.constant 1.000000e+00 : f32
    %22 = vector.broadcast %cst_10 : f32 to vector<1x384xf32>
    %23 = arith.subf %21, %22 : vector<1x384xf32>
    %cst_11 = arith.constant 1.000000e+00 : f32
    %24 = vector.broadcast %cst_11 : f32 to vector<1x384xf32>
    %25 = arith.addf %23, %24 : vector<1x384xf32>
    %cst_12 = arith.constant 1.600000e+01 : f32
    %26 = vector.broadcast %cst_12 : f32 to vector<1x384xf32>
    %27 = arith.mulf %25, %26 : vector<1x384xf32>
    %cst_13 = arith.constant 1.000000e+00 : f32
    %28 = vector.broadcast %cst_13 : f32 to vector<1x384xf32>
    %29 = arith.subf %27, %28 : vector<1x384xf32>
    %cst_14 = arith.constant 5.000000e-01 : f32
    %30 = vector.broadcast %cst_14 : f32 to vector<1x384xf32>
    %31 = arith.mulf %29, %30 : vector<1x384xf32>
    %32 = tpu.iota {dimensions = array<i32: 0>} : vector<16x384xi32>
    %33 = arith.sitofp %32 : vector<16x384xi32> to vector<16x384xf32>
    %34 = tpu.iota {dimensions = array<i32: 0>} : vector<16x384xi32>
    %35 = arith.sitofp %34 : vector<16x384xi32> to vector<16x384xf32>
    %36 = vector.broadcast %17 : vector<1x384xf32> to vector<16x384xf32>
    %37 = arith.subf %33, %36 : vector<16x384xf32>
    %38 = math.absf %37 : vector<16x384xf32>
    %cst_15 = arith.constant 1.000000e+00 : f32
    %39 = vector.broadcast %cst_15 : f32 to vector<16x384xf32>
    %40 = arith.subf %39, %38 : vector<16x384xf32>
    %cst_16 = arith.constant 0.000000e+00 : f32
    %41 = vector.broadcast %cst_16 : f32 to vector<16x384xf32>
    %42 = arith.maximumf %40, %41 : vector<16x384xf32>
    %43 = vector.broadcast %31 : vector<1x384xf32> to vector<16x384xf32>
    %44 = arith.subf %35, %43 : vector<16x384xf32>
    %45 = math.absf %44 : vector<16x384xf32>
    %cst_17 = arith.constant 1.000000e+00 : f32
    %46 = vector.broadcast %cst_17 : f32 to vector<16x384xf32>
    %47 = arith.subf %46, %45 : vector<16x384xf32>
    %cst_18 = arith.constant 0.000000e+00 : f32
    %48 = vector.broadcast %cst_18 : f32 to vector<16x384xf32>
    %49 = arith.maximumf %47, %48 : vector<16x384xf32>
    %50 = vector.shape_cast %42 : vector<16x384xf32> to vector<16x1x384xf32>
    %51 = vector.shape_cast %49 : vector<16x384xf32> to vector<1x16x384xf32>
    %52 = vector.broadcast %50 : vector<16x1x384xf32> to vector<16x16x384xf32>
    %53 = vector.broadcast %51 : vector<1x16x384xf32> to vector<16x16x384xf32>
    %54 = arith.mulf %52, %53 : vector<16x16x384xf32>
    %55 = vector.shape_cast %54 : vector<16x16x384xf32> to vector<256x384xf32>
    %56 = arith.truncf %55 : vector<256x384xf32> to vector<256x384xbf16>
    %c0_19 = arith.constant 0 : index
    %c0_20 = arith.constant 0 : index
    %c0_21 = arith.constant 0 : index
    %57 = vector.load %arg4[%c0_19, %c0_20, %c0_21] : memref<1x256x256xbf16, #tpu.memory_space<vmem>>, vector<1x256x256xbf16>
    %58 = vector.shape_cast %57 : vector<1x256x256xbf16> to vector<256x256xbf16>
    %cst_22 = arith.constant dense<0.000000e+00> : vector<256x384xf32>
    %59 = tpu.matmul %58, %56, %cst_22 {dimension_numbers = #tpu.dot_dimension_numbers<[1], [0], [0], [1], [0, 0, 1, 1], [], []>} : vector<256x256xbf16>, vector<256x384xbf16>, vector<256x384xf32> -> vector<256x384xf32>
    %c0_23 = arith.constant 0 : index
    %c0_24 = arith.constant 0 : index
    %60 = vector.load %arg5[%c0_23, %c0_24] : memref<256x1xf32, #tpu.memory_space<vmem>>, vector<256x1xf32>
    %61 = vector.broadcast %60 : vector<256x1xf32> to vector<256x384xf32>
    %62 = arith.addf %59, %61 : vector<256x384xf32>
    %cst_25 = arith.constant 0.000000e+00 : f32
    %63 = vector.broadcast %cst_25 : f32 to vector<256x384xf32>
    %64 = arith.maximumf %62, %63 : vector<256x384xf32>
    %c0_26 = arith.constant 0 : index
    %c0_27 = arith.constant 0 : index
    %65 = vector.load %arg6[%c0_26, %c0_27] : memref<2x256xbf16, #tpu.memory_space<vmem>>, vector<2x256xbf16>
    %66 = arith.truncf %64 : vector<256x384xf32> to vector<256x384xbf16>
    %cst_28 = arith.constant dense<0.000000e+00> : vector<2x384xf32>
    %67 = tpu.matmul %65, %66, %cst_28 {dimension_numbers = #tpu.dot_dimension_numbers<[1], [0], [0], [1], [0, 0, 1, 1], [], []>} : vector<2x256xbf16>, vector<256x384xbf16>, vector<2x384xf32> -> vector<2x384xf32>
    %c0_29 = arith.constant 0 : index
    %c0_30 = arith.constant 0 : index
    %68 = vector.load %arg7[%c0_29, %c0_30] : memref<2x1xf32, #tpu.memory_space<vmem>>, vector<2x1xf32>
    %69 = vector.broadcast %68 : vector<2x1xf32> to vector<2x384xf32>
    %70 = arith.addf %67, %69 : vector<2x384xf32>
    %c0_31 = arith.constant 0 : index
    %c0_32 = arith.constant 0 : index
    %c0_33 = arith.constant 0 : index
    %71 = vector.load %arg8[%c0_31, %c0_32, %c0_33] : memref<1x2x384xf32, #tpu.memory_space<vmem>>, vector<1x2x384xf32>
    %72 = vector.shape_cast %71 : vector<1x2x384xf32> to vector<2x384xf32>
    %73 = vector.shape_cast %70 : vector<2x384xf32> to vector<1x2x384xf32>
    tpu.vector_store %arg8[%c0_31, %c0_32, %c0_33], %73 {strides = array<i32>} : memref<1x2x384xf32, #tpu.memory_space<vmem>>, vector<1x2x384xf32>,
    return
  }
  func.func @transform_0(%arg0: i32, %arg1: i32, %arg2: memref<3xi32, #tpu.memory_space<smem>>) -> (i32, i32, i32) {
    %c0_i32 = arith.constant 0 : i32
    %c0_i32_0 = arith.constant 0 : i32
    return %arg0, %c0_i32, %arg1 : i32, i32, i32
  }
  func.func @transform_1(%arg0: i32, %arg1: i32, %arg2: memref<3xi32, #tpu.memory_space<smem>>) -> (i32, i32, i32) {
    %0 = arith.index_cast %arg0 : i32 to index
    %1 = memref.load %arg2[%0] : memref<3xi32, #tpu.memory_space<smem>>
    %c0_i32 = arith.constant 0 : i32
    %c0_i32_0 = arith.constant 0 : i32
    %c0_i32_1 = arith.constant 0 : i32
    return %1, %c0_i32, %c0_i32_0 : i32, i32, i32
  }
  func.func @transform_2(%arg0: i32, %arg1: i32, %arg2: memref<3xi32, #tpu.memory_space<smem>>) -> (i32, i32) {
    %c0_i32 = arith.constant 0 : i32
    %c0_i32_0 = arith.constant 0 : i32
    %c0_i32_1 = arith.constant 0 : i32
    return %c0_i32, %c0_i32_0 : i32, i32
  }
  func.func @transform_3(%arg0: i32, %arg1: i32, %arg2: memref<3xi32, #tpu.memory_space<smem>>) -> (i32, i32) {
    %c0_i32 = arith.constant 0 : i32
    %c0_i32_0 = arith.constant 0 : i32
    %c0_i32_1 = arith.constant 0 : i32
    return %c0_i32, %c0_i32_0 : i32, i32
  }
  func.func @transform_4(%arg0: i32, %arg1: i32, %arg2: memref<3xi32, #tpu.memory_space<smem>>) -> (i32, i32) {
    %c0_i32 = arith.constant 0 : i32
    %c0_i32_0 = arith.constant 0 : i32
    %c0_i32_1 = arith.constant 0 : i32
    return %c0_i32, %c0_i32_0 : i32, i32
  }
  func.func @transform_5(%arg0: i32, %arg1: i32, %arg2: memref<3xi32, #tpu.memory_space<smem>>) -> (i32, i32, i32) {
    %c0_i32 = arith.constant 0 : i32
    %c0_i32_0 = arith.constant 0 : i32
    return %arg0, %c0_i32, %arg1 : i32, i32, i32
  }
}

</mosaic_0001>

<llo_original>
// kernel: tpu_custom_call.1
$region0: #{tpu_custom_call.1}
  #allocation0 [shape = 'u32[]', space=smem, size = 0x4, offset = 0x4, fixed_abs, tag = 'smem constant byte address 0x4 - core index']
  #allocation1 [shape = 'u32[144,128]{1,0:T(1,128)}', space=vmem, size = 0x12000, scoped, tag = 'internal scratch']
  #allocation2 [shape = 's32[1]{0}', space=sflag, size = 0x4, scoped, tag = 'scoped memory for tpu_custom_call.1']
  #allocation3 [shape = 'u8[512]{0}', space=smem, size = 0x200, scoped, tag = 'prefetched SMEM operand 0']
  %s0 = inlined_call_operand.vmem [shape: s32[3], index: 0, kind: input, shape index: {}]
  %s1 = inlined_call_operand.vmem [shape: f32[3,2,768], index: 1, kind: input, shape index: {}]
  %s2 = inlined_call_operand.hbm [shape: bf16[2,256,256], index: 2, kind: input, shape index: {}]
  %s3 = inlined_call_operand.vmem [shape: f32[256,1], index: 3, kind: input, shape index: {}]
  %s4 = inlined_call_operand.vmem [shape: bf16[2,256], index: 4, kind: input, shape index: {}]
  %s5 = inlined_call_operand.vmem [shape: f32[2,1], index: 5, kind: input, shape index: {}]
  %s6 = inlined_call_operand.hbm [shape: f32[3,2,768], index: 6, kind: output, shape index: {}]
  %s7 = sld [smem:[#allocation0]]
  $region57: #{tpu_custom_call.1} parent=0
    _
  %s9 = ssub.s32 1, %s7
  %s10 = scalar_select 0, %s9, %s7
  %s11 = sshll.u32 %s0, 4
  %s12 = int_to_ptr.vmem [resolvable:$true] %s11
  %14 = dma.vmem_to_smem %s12, 16, [#allocation3], [#allocation2]
  %15 = dma.done [#allocation2], 16
  %16 = sfence
  $region1: #{tpu_custom_call.1} parent=0
    #allocation4 [shape = 'u8[262144]{0}', space=vmem, size = 0x40000, scoped, tag = 'input window, operand 2']
    #allocation5 [shape = 's32[2]{0}', space=sflag, size = 0x8, scoped, tag = 'scoped memory for tpu_custom_call.1']
    #allocation6 [shape = 's32[2]{0}', space=sflag, size = 0x8, scoped, tag = 'scoped memory for tpu_custom_call.1']
    #allocation7 [shape = 'u8[6144]{0}', space=vmem, size = 0x1800, scoped, tag = 'output window, operand 0']
    %17 = vsyncpa [#allocation5], 0
    %s18 = scalar_lea.sflag [#allocation5], 1
    %19 = vsyncpa %s18, 0
    %20 = vsyncpa [#allocation6], 0
    %s21 = scalar_lea.sflag [#allocation6], 1
    %22 = vsyncpa %s21, 0
    loop: start=0, step=1, limit=8
    $region2: #{tpu_custom_call.1} parent=1 // loop_pre_header
      _
    $region3: #{tpu_custom_call.1} parent=1 // loop_header
      %s24 = sphi 0, %s28
      %p25 = scmp.ge.s32.totalorder %s24, 8
      %s31 = sphi 0, %s43
      %s32 = sphi 0, %s39
      %s33 = sphi 0, %s31
      %s34 = sphi 0, %s32
      %s35 = sphi 0, %s33
      %s36 = sphi 0, %s34
      %s48 = sphi 0, %s50
      %s51 = sphi 0, %s48
      %s52 = sphi 0, %s51
      %s68 = sphi 0, %s52
      %s76 = sphi 0, %s78
      %s79 = sphi 0, %s76
      %s80 = sphi 0, %s79
      %s96 = sphi 0, %s80
      %s100 = sphi 0, %s100
      %s102 = sphi 0, %s100
      %s103 = sphi 0, %s102
      %s117 = sphi 0, %s103
      %s121 = sphi 0, %s121
      %s123 = sphi 0, %s121
      %s124 = sphi 0, %s123
      %s138 = sphi 0, %s124
      %s142 = sphi 0, %s142
      %s144 = sphi 0, %s142
      %s145 = sphi 0, %s144
      %s159 = sphi 0, %s145
      %s167 = sphi 0, %s169
      %s170 = sphi 0, %s167
      %s171 = sphi 0, %s170
      %s187 = sphi 0, %s171
    $region4: #{tpu_custom_call.1} parent=1 // loop_header_branch
      %27 = sbr.rel (%p25) target = $region8
    $region5: #{tpu_custom_call.1} parent=1 // loop_body
      %s29 = ssub.s32 %s24, 1
      %s30 = ssub.s32 %s24, 2
      %s37 = sadd.s32 1, %s32
      %p38 = scmp.ge.s32.totalorder %s37, 2
      %s39 = scalar_select %p38, 0, %s37
      %s40 = sadd.s32 1, %s31
      %s41 = scalar_select %p38, %s40, %s31
      %p42 = scmp.ge.s32.totalorder %s41, 3
      %s43 = scalar_select %p42, 0, %s41
      %s44 = ssub.s32 %s31, %s43
      %s45 = ssub.s32 %s32, %s39
      %s46 = sor.u32 %s44, %s45
      %p47 = scmp.eq.s32.totalorder %s46, 0
      %s49 = sadd.s32 %s48, 1
      %s50 = scalar_select %p47, %s48, %s49
      %p53 = pneg %p47
      %p54 = scmp.eq.s32.totalorder %s24, 5
      %p55 = por %p53, %p54
      %p56 = scmp.ne.s32.totalorder %s48, %s51
      %p57 = scmp.eq.s32.totalorder %s24, 0
      %p58 = por %p56, %p57
      %p59 = scmp.ne.s32.totalorder %s48, %s51
      %p60 = scmp.eq.s32.totalorder %s29, 5
      %p61 = por %p59, %p60
      %p62 = scmp.ne.s32.totalorder %s51, %s52
      %p63 = scmp.eq.s32.totalorder %s29, 0
      %p64 = por %p62, %p63
      %p65 = scmp.ne.s32.totalorder %s51, %s52
      %p66 = scmp.eq.s32.totalorder %s30, 5
      %p67 = por %p65, %p66
      %p69 = scmp.ne.s32.totalorder %s52, %s68
      %p70 = scmp.eq.s32.totalorder %s30, 0
      %p71 = por %p69, %p70
      %s72 = sld [smem:[#allocation3 + %s31]]
      %s73 = sld [smem:[#allocation3 + %s43]]
      %s74 = ssub.s32 %s72, %s73
      %p75 = scmp.eq.s32.totalorder %s74, 0
      %s77 = sadd.s32 %s76, 1
      %s78 = scalar_select %p75, %s76, %s77
      %p81 = pneg %p75
      %p82 = scmp.eq.s32.totalorder %s24, 5
      %p83 = por %p81, %p82
      %p84 = scmp.ne.s32.totalorder %s76, %s79
      %p85 = scmp.eq.s32.totalorder %s24, 0
      %p86 = por %p84, %p85
      %p87 = scmp.ne.s32.totalorder %s76, %s79
      %p88 = scmp.eq.s32.totalorder %s29, 5
      %p89 = por %p87, %p88
      %p90 = scmp.ne.s32.totalorder %s79, %s80
      %p91 = scmp.eq.s32.totalorder %s29, 0
      %p92 = por %p90, %p91
      %p93 = scmp.ne.s32.totalorder %s79, %s80
      %p94 = scmp.eq.s32.totalorder %s30, 5
      %p95 = por %p93, %p94
      %p97 = scmp.ne.s32.totalorder %s80, %s96
      %p98 = scmp.eq.s32.totalorder %s30, 0
      %p99 = por %p97, %p98
      %s101 = sadd.s32 %s100, 1
      %p104 = scmp.eq.s32.totalorder %s24, 5
      %p105 = scmp.ne.s32.totalorder %s100, %s102
      %p106 = scmp.eq.s32.totalorder %s24, 0
      %p107 = por %p105, %p106
      %p108 = scmp.ne.s32.totalorder %s100, %s102
      %p109 = scmp.eq.s32.totalorder %s29, 5
      %p110 = por %p108, %p109
      %p111 = scmp.ne.s32.totalorder %s102, %s103
      %p112 = scmp.eq.s32.totalorder %s29, 0
      %p113 = por %p111, %p112
      %p114 = scmp.ne.s32.totalorder %s102, %s103
      %p115 = scmp.eq.s32.totalorder %s30, 5
      %p116 = por %p114, %p115
      %p118 = scmp.ne.s32.totalorder %s103, %s117
      %p119 = scmp.eq.s32.totalorder %s30, 0
      %p120 = por %p118, %p119
      %s122 = sadd.s32 %s121, 1
      %p125 = scmp.eq.s32.totalorder %s24, 5
      %p126 = scmp.ne.s32.totalorder %s121, %s123
      %p127 = scmp.eq.s32.totalorder %s24, 0
      %p128 = por %p126, %p127
      %p129 = scmp.ne.s32.totalorder %s121, %s123
      %p130 = scmp.eq.s32.totalorder %s29, 5
      %p131 = por %p129, %p130
      %p132 = scmp.ne.s32.totalorder %s123, %s124
      %p133 = scmp.eq.s32.totalorder %s29, 0
      %p134 = por %p132, %p133
      %p135 = scmp.ne.s32.totalorder %s123, %s124
      %p136 = scmp.eq.s32.totalorder %s30, 5
      %p137 = por %p135, %p136
      %p139 = scmp.ne.s32.totalorder %s124, %s138
      %p140 = scmp.eq.s32.totalorder %s30, 0
      %p141 = por %p139, %p140
      %s143 = sadd.s32 %s142, 1
      %p146 = scmp.eq.s32.totalorder %s24, 5
      %p147 = scmp.ne.s32.totalorder %s142, %s144
      %p148 = scmp.eq.s32.totalorder %s24, 0
      %p149 = por %p147, %p148
      %p150 = scmp.ne.s32.totalorder %s142, %s144
      %p151 = scmp.eq.s32.totalorder %s29, 5
      %p152 = por %p150, %p151
      %p153 = scmp.ne.s32.totalorder %s144, %s145
      %p154 = scmp.eq.s32.totalorder %s29, 0
      %p155 = por %p153, %p154
      %p156 = scmp.ne.s32.totalorder %s144, %s145
      %p157 = scmp.eq.s32.totalorder %s30, 5
      %p158 = por %p156, %p157
      %p160 = scmp.ne.s32.totalorder %s145, %s159
      %p161 = scmp.eq.s32.totalorder %s30, 0
      %p162 = por %p160, %p161
      %s163 = ssub.s32 %s31, %s43
      %s164 = ssub.s32 %s32, %s39
      %s165 = sor.u32 %s163, %s164
      %p166 = scmp.eq.s32.totalorder %s165, 0
      %s168 = sadd.s32 %s167, 1
      %s169 = scalar_select %p166, %s167, %s168
      %p172 = pneg %p166
      %p173 = scmp.eq.s32.totalorder %s24, 5
      %p174 = por %p172, %p173
      %p175 = scmp.ne.s32.totalorder %s167, %s170
      %p176 = scmp.eq.s32.totalorder %s24, 0
      %p177 = por %p175, %p176
      %p178 = scmp.ne.s32.totalorder %s167, %s170
      %p179 = scmp.eq.s32.totalorder %s29, 5
      %p180 = por %p178, %p179
      %p181 = scmp.ne.s32.totalorder %s170, %s171
      %p182 = scmp.eq.s32.totalorder %s29, 0
      %p183 = por %p181, %p182
      %p184 = scmp.ne.s32.totalorder %s170, %s171
      %p185 = scmp.eq.s32.totalorder %s30, 5
      %p186 = por %p184, %p185
      %p188 = scmp.ne.s32.totalorder %s171, %s187
      %p189 = scmp.eq.s32.totalorder %s30, 0
      %p190 = por %p188, %p189
      %p191 = scmp.le.s32.totalorder 1, %s24
      %p192 = scmp.lt.s32.totalorder %s24, 7
      %p193 = pnand %p191, %p192
      %p194 = pneg %p193
      // Predicated region
      $region9: #{tpu_custom_call.1} parent=5 // pred_check
        _
      $region10: #{tpu_custom_call.1} parent=5 // pred_check_branch
        %196 = sbr.rel (%p193) target = $region12
      $region11: #{tpu_custom_call.1} parent=5 // pred_region
        %s197 = ssub.s32 %s24, 1
        // Predicated region
        $region13: #{tpu_custom_call.1} parent=11 // pred_check
          %p198 = pneg %p113
        $region14: #{tpu_custom_call.1} parent=11 // pred_check_branch
          %200 = sbr.rel (%p198) target = $region16
        $region15: #{tpu_custom_call.1} parent=11 // pred_region
          _
        $region16: #{tpu_custom_call.1} parent=11 // pred_fallthru
          _
        // Predicated region
        $region17: #{tpu_custom_call.1} parent=11 // pred_check
          %p201 = pneg %p134
        $region18: #{tpu_custom_call.1} parent=11 // pred_check_branch
          %203 = sbr.rel (%p201) target = $region20
        $region19: #{tpu_custom_call.1} parent=11 // pred_region
          _
        $region20: #{tpu_custom_call.1} parent=11 // pred_fallthru
          _
        // Predicated region
        $region21: #{tpu_custom_call.1} parent=11 // pred_check
          %p204 = pneg %p155
        $region22: #{tpu_custom_call.1} parent=11 // pred_check_branch
          %206 = sbr.rel (%p204) target = $region24
        $region23: #{tpu_custom_call.1} parent=11 // pred_region
          _
        $region24: #{tpu_custom_call.1} parent=11 // pred_fallthru
          _
      $region12: #{tpu_custom_call.1} parent=5 // pred_fallthru
        _
      %p207 = scmp.lt.s32.totalorder %s24, 6
      // Predicated region
      $region25: #{tpu_custom_call.1} parent=5 // pred_check
        %p208 = pneg %p207
      $region26: #{tpu_custom_call.1} parent=5 // pred_check_branch
        %210 = sbr.rel (%p208) target = $region28
      $region27: #{tpu_custom_call.1} parent=5 // pred_region
        // Predicated region
        $region29: #{tpu_custom_call.1} parent=27 // pred_check
          %p211 = pneg %p58
        $region30: #{tpu_custom_call.1} parent=27 // pred_check_branch
          %213 = sbr.rel (%p211) target = $region32
        $region31: #{tpu_custom_call.1} parent=27 // pred_region
          %s214 = smul.u32 3, %s32
          %p215 = scmp.lt.s32.totalorder %s31, 2
          %s216 = scalar_select %p215, %s31, 2
          %p217 = scmp.lt.s32.totalorder %s214, 5
          %s218 = scalar_select %p217, %s214, 5
          %s219 = smul.addr %s216, 6
          %s220 = sadd.s32 %s218, %s219
          %s221 = smul.addr %s220, 2
          %s222 = scalar_lea.vmem %s1, %s221
          %s223 = smul.u32 3, %s32
        $region32: #{tpu_custom_call.1} parent=27 // pred_fallthru
          _
        // Predicated region
        $region33: #{tpu_custom_call.1} parent=27 // pred_check
          %p224 = pneg %p86
        $region34: #{tpu_custom_call.1} parent=27 // pred_check_branch
          %226 = sbr.rel (%p224) target = $region36
        $region35: #{tpu_custom_call.1} parent=27 // pred_region
          %s227 = sand.u32 %s76, 1
          %s228 = scalar_lea.sflag [#allocation5], %s227
          %s229 = sand.u32 %s76, 1
          %s230 = smul.addr %s229, 256
          %s231 = scalar_lea.vmem [#allocation4], %s230
          %s232 = sld [smem:[#allocation3 + %s31]]
          %s234 = ssub.s32 4096, 4096
          %235 = vsyncadd %s228, %s234
          %s236 = smul.addr %s232, 64
          %s237 = smul.addr %s236, 64
          %s238 = scalar_lea.hbm %s2, %s237
          %s239 = sshll.u32 %s231, 4
          %s240 = int_to_ptr.vmem [resolvable:$true] %s239
          %245 = dma.hbm_to_vmem [thread:$0]  %s238, 4096, %s240, %s228, 128, 128, 8
        $region36: #{tpu_custom_call.1} parent=27 // pred_fallthru
          _
      $region28: #{tpu_custom_call.1} parent=5 // pred_fallthru
        _
      %p246 = scmp.le.s32.totalorder 1, %s24
      %p247 = scmp.lt.s32.totalorder %s24, 7
      %p248 = pnand %p246, %p247
      %p249 = pneg %p248
      // Predicated region
      $region37: #{tpu_custom_call.1} parent=5 // pred_check
        _
      $region38: #{tpu_custom_call.1} parent=5 // pred_check_branch
        %251 = sbr.rel (%p248) target = $region40
      $region39: #{tpu_custom_call.1} parent=5 // pred_region
        %s252 = ssub.s32 %s24, 1
        %s253 = sand.u32 %s79, 1
        %s254 = scalar_lea.sflag [#allocation5], %s253
        %s255 = sand.u32 %s79, 1
        %s256 = smul.addr %s255, 256
        %s257 = scalar_lea.vmem [#allocation4], %s256
        // Predicated region
        $region41: #{tpu_custom_call.1} parent=39 // pred_check
          %p258 = pneg %p92
        $region42: #{tpu_custom_call.1} parent=39 // pred_check_branch
          %260 = sbr.rel (%p258) target = $region44
        $region43: #{tpu_custom_call.1} parent=39 // pred_region
          %261 = dma.done %s254, 4096
        $region44: #{tpu_custom_call.1} parent=39 // pred_fallthru
          _
        %s262 = smul.u32 3, %s34
        %p263 = scmp.lt.s32.totalorder %s33, 2
        %s264 = scalar_select %p263, %s33, 2
        %p265 = scmp.lt.s32.totalorder %s262, 5
        %s266 = scalar_select %p265, %s262, 5
        %s267 = smul.addr %s264, 6
        %s268 = sadd.s32 %s266, %s267
        %s269 = smul.addr %s268, 2
        %s270 = scalar_lea.vmem %s1, %s269
        %p271 = pneg %p64
        %p272 = pneg %p61
        %s273 = sand.u32 %s79, 1
        %s274 = scalar_lea.sflag [#allocation5], %s273
        %s275 = sand.u32 %s79, 1
        %s276 = smul.addr %s275, 256
        %s277 = scalar_lea.vmem [#allocation4], %s276
        %p278 = pneg %p92
        %p279 = pneg %p89
        %p280 = pneg %p113
        %p281 = pneg %p110
        %p282 = pneg %p134
        %p283 = pneg %p131
        %p284 = pneg %p155
        %p285 = pneg %p152
        %p286 = pneg %p183
        %p287 = pneg %p180
        %s288 = sand.u32 %s170, 1
        %s289 = scalar_lea.sflag [#allocation6], %s288
        %s290 = sand.u32 %s170, 1
        %s291 = smul.addr %s290, 6
        %s292 = scalar_lea.vmem [#allocation7], %s291
        %s293 = smul.u32 3, %s34
        %p294 = scmp.lt.s32.totalorder %s33, 2
        %s295 = scalar_select %p294, %s33, 2
        %p296 = scmp.lt.s32.totalorder %s293, 5
        %s297 = scalar_select %p296, %s293, 5
        %s298 = smul.addr %s295, 6
        %s299 = sadd.s32 %s297, %s298
        %s300 = smul.addr %s299, 2
        %s301 = scalar_lea.vmem %s1, %s300
        %s302 = smul.u32 3, %s34
        %s303 = sld [smem:[#allocation3 + %s33]]
        %s304 = smul.u32 3, %s34
        %v306 = vld [vmem:[%s301] sm:$0x3f]
        %v307 = vmul.f32 %v306, 2.0
        %v308 = vrcp.pop 15.0
        %v309 = vmul.f32 %v307, %v308
        %v310 = vsub.f32 %v309, 1.0
        %v311 = vadd.f32 %v310, 1.0
        %v312 = vmul.f32 %v311, 16.0
        %v313 = vsub.f32 %v312, 1.0
        %v314 = vmul.f32 %v313, 0.5
        %v315 = vlaneseq
        %v316 = vshrl.u32 %v315, 7
        %v317 = vadd.s32 %v316, 8
        %v318 = vcvt.s32.f32 %v316
        %v319 = vcvt.s32.f32 %v317
        %v321 = vlaneseq
        %v322 = vshrl.u32 %v321, 7
        %v323 = vsub.s32 0, %v322
        %v324 = vrot.slane %v314, %v323
        %v325 = vlaneseq
        %v326 = vshrl.u32 %v325, 7
        %v327 = vsub.s32 2, %v326
        %v328 = vrot.slane %v314, %v327
        %v329 = vlaneseq
        %v330 = vshrl.u32 %v329, 7
        %v331 = vsub.s32 4, %v330
        %v332 = vrot.slane %v314, %v331
        %v336 = vlaneseq
        %v337 = vshrl.u32 %v336, 7
        %v338 = vsub.s32 0, %v337
        %v339 = vrot.slane %v324, %v338
        %v340 = vlaneseq
        %v341 = vshrl.u32 %v340, 7
        %v342 = vsub.s32 0, %v341
        %v343 = vrot.slane %v328, %v342
        %v344 = vlaneseq
        %v345 = vshrl.u32 %v344, 7
        %v346 = vsub.s32 0, %v345
        %v347 = vrot.slane %v332, %v346
        %v348 = vsub.f32 %v318, %v339
        %v349 = vsub.f32 %v318, %v343
        %v350 = vsub.f32 %v318, %v347
        %v351 = vsub.f32 %v319, %v339
        %v352 = vsub.f32 %v319, %v343
        %v353 = vsub.f32 %v319, %v347
        %v354 = vand.u32 2147483647, %v348
        %v355 = vand.u32 2147483647, %v349
        %v356 = vand.u32 2147483647, %v350
        %v357 = vand.u32 2147483647, %v351
        %v358 = vand.u32 2147483647, %v352
        %v359 = vand.u32 2147483647, %v353
        %v360 = vsub.f32 1.0, %v354
        %v361 = vsub.f32 1.0, %v355
        %v362 = vsub.f32 1.0, %v356
        %v363 = vsub.f32 1.0, %v357
        %v364 = vsub.f32 1.0, %v358
        %v365 = vsub.f32 1.0, %v359
        %v366 = vmax.f32 %v360, 0.0
        %v367 = vmax.f32 %v361, 0.0
        %v368 = vmax.f32 %v362, 0.0
        %v369 = vmax.f32 %v363, 0.0
        %v370 = vmax.f32 %v364, 0.0
        %v371 = vmax.f32 %v365, 0.0
        %v372 = vlaneseq
        %v373 = vshrl.u32 %v372, 7
        %v374 = vsub.s32 1, %v373
        %v375 = vrot.slane %v314, %v374
        %v376 = vlaneseq
        %v377 = vshrl.u32 %v376, 7
        %v378 = vsub.s32 3, %v377
        %v379 = vrot.slane %v314, %v378
        %v380 = vlaneseq
        %v381 = vshrl.u32 %v380, 7
        %v382 = vsub.s32 5, %v381
        %v383 = vrot.slane %v314, %v382
        %v387 = vlaneseq
        %v388 = vshrl.u32 %v387, 7
        %v389 = vsub.s32 1, %v388
        %v390 = vrot.slane %v375, %v389
        %v391 = vlaneseq
        %v392 = vshrl.u32 %v391, 7
        %v393 = vsub.s32 1, %v392
        %v394 = vrot.slane %v379, %v393
        %v395 = vlaneseq
        %v396 = vshrl.u32 %v395, 7
        %v397 = vsub.s32 1, %v396
        %v398 = vrot.slane %v383, %v397
        %v399 = vsub.f32 %v318, %v390
        %v400 = vsub.f32 %v318, %v394
        %v401 = vsub.f32 %v318, %v398
        %v402 = vsub.f32 %v319, %v390
        %v403 = vsub.f32 %v319, %v394
        %v404 = vsub.f32 %v319, %v398
        %v405 = vand.u32 2147483647, %v399
        %v406 = vand.u32 2147483647, %v400
        %v407 = vand.u32 2147483647, %v401
        %v408 = vand.u32 2147483647, %v402
        %v409 = vand.u32 2147483647, %v403
        %v410 = vand.u32 2147483647, %v404
        %v411 = vsub.f32 1.0, %v405
        %v412 = vsub.f32 1.0, %v406
        %v413 = vsub.f32 1.0, %v407
        %v414 = vsub.f32 1.0, %v408
        %v415 = vsub.f32 1.0, %v409
        %v416 = vsub.f32 1.0, %v410
        %v417 = vmax.f32 %v411, 0.0
        %v418 = vmax.f32 %v412, 0.0
        %v419 = vmax.f32 %v413, 0.0
        %v420 = vmax.f32 %v414, 0.0
        %v421 = vmax.f32 %v415, 0.0
        %v422 = vmax.f32 %v416, 0.0
        %v429 = vcombine.low %v366, %v367
        %v430 = vcombine.high %v366, %v367
        %v431 = vcombine.high %v368, %v368
        %v433 = vunpack.c.l.s4 1966171168
        %v434 = vunpack.c.0.s8 %v433
        %v435 = vlaneseq
        %v436 = vshrl.u32 %v435, 7
        %v437 = vsub.s32 %v434, %v436
        %v438 = vrot.slane %v429, %v437
        %v440 = vunpack.c.l.s4 1966171168
        %v441 = vunpack.c.0.s8 %v440
        %v442 = vlaneseq
        %v443 = vshrl.u32 %v442, 7
        %v444 = vsub.s32 %v441, %v443
        %v445 = vrot.slane %v430, %v444
        %v447 = vunpack.c.l.s4 1966171168
        %v448 = vunpack.c.0.s8 %v447
        %v449 = vlaneseq
        %v450 = vshrl.u32 %v449, 7
        %v451 = vsub.s32 %v448, %v450
        %v452 = vrot.slane %v368, %v451
        %v454 = vunpack.c.l.s4 1966171168
        %v455 = vunpack.c.0.s8 %v454
        %v456 = vlaneseq
        %v457 = vshrl.u32 %v456, 7
        %v458 = vsub.s32 %v455, %v457
        %v459 = vrot.slane %v431, %v458
        %v460 = vcombine.low %v438, %v452
        %v461 = vcombine.high %v438, %v452
        %v462 = vcombine.low %v445, %v459
        %v463 = vcombine.high %v445, %v459
        %v465 = vunpack.c.l.s4 1966171168
        %v466 = vunpack.c.0.s8 %v465
        %v467 = vlaneseq
        %v468 = vshrl.u32 %v467, 7
        %v469 = vsub.s32 %v466, %v468
        %v470 = vrot.slane %v460, %v469
        %v472 = vunpack.c.l.s4 1966171168
        %v473 = vunpack.c.0.s8 %v472
        %v474 = vlaneseq
        %v475 = vshrl.u32 %v474, 7
        %v476 = vsub.s32 %v473, %v475
        %v477 = vrot.slane %v462, %v476
        %v479 = vunpack.c.l.s4 1966171168
        %v480 = vunpack.c.0.s8 %v479
        %v481 = vlaneseq
        %v482 = vshrl.u32 %v481, 7
        %v483 = vsub.s32 %v480, %v482
        %v484 = vrot.slane %v461, %v483
        %v486 = vunpack.c.l.s4 1966171168
        %v487 = vunpack.c.0.s8 %v486
        %v488 = vlaneseq
        %v489 = vshrl.u32 %v488, 7
        %v490 = vsub.s32 %v487, %v489
        %v491 = vrot.slane %v463, %v490
        %v492 = vcombine.high %v470, %v470
        %v493 = vcombine.high %v477, %v477
        %v494 = vcombine.high %v484, %v484
        %v495 = vcombine.high %v491, %v491
        %v496 = vcombine.low %v369, %v370
        %v497 = vcombine.high %v369, %v370
        %v498 = vcombine.high %v371, %v371
        %v500 = vunpack.c.l.s4 1966171168
        %v501 = vunpack.c.0.s8 %v500
        %v502 = vlaneseq
        %v503 = vshrl.u32 %v502, 7
        %v504 = vsub.s32 %v501, %v503
        %v505 = vrot.slane %v496, %v504
        %v507 = vunpack.c.l.s4 1966171168
        %v508 = vunpack.c.0.s8 %v507
        %v509 = vlaneseq
        %v510 = vshrl.u32 %v509, 7
        %v511 = vsub.s32 %v508, %v510
        %v512 = vrot.slane %v497, %v511
        %v514 = vunpack.c.l.s4 1966171168
        %v515 = vunpack.c.0.s8 %v514
        %v516 = vlaneseq
        %v517 = vshrl.u32 %v516, 7
        %v518 = vsub.s32 %v515, %v517
        %v519 = vrot.slane %v371, %v518
        %v521 = vunpack.c.l.s4 1966171168
        %v522 = vunpack.c.0.s8 %v521
        %v523 = vlaneseq
        %v524 = vshrl.u32 %v523, 7
        %v525 = vsub.s32 %v522, %v524
        %v526 = vrot.slane %v498, %v525
        %v527 = vcombine.low %v505, %v519
        %v528 = vcombine.high %v505, %v519
        %v529 = vcombine.low %v512, %v526
        %v530 = vcombine.high %v512, %v526
        %v532 = vunpack.c.l.s4 1966171168
        %v533 = vunpack.c.0.s8 %v532
        %v534 = vlaneseq
        %v535 = vshrl.u32 %v534, 7
        %v536 = vsub.s32 %v533, %v535
        %v537 = vrot.slane %v527, %v536
        %v539 = vunpack.c.l.s4 1966171168
        %v540 = vunpack.c.0.s8 %v539
        %v541 = vlaneseq
        %v542 = vshrl.u32 %v541, 7
        %v543 = vsub.s32 %v540, %v542
        %v544 = vrot.slane %v529, %v543
        %v546 = vunpack.c.l.s4 1966171168
        %v547 = vunpack.c.0.s8 %v546
        %v548 = vlaneseq
        %v549 = vshrl.u32 %v548, 7
        %v550 = vsub.s32 %v547, %v549
        %v551 = vrot.slane %v528, %v550
        %v553 = vunpack.c.l.s4 1966171168
        %v554 = vunpack.c.0.s8 %v553
        %v555 = vlaneseq
        %v556 = vshrl.u32 %v555, 7
        %v557 = vsub.s32 %v554, %v556
        %v558 = vrot.slane %v530, %v557
        %v559 = vcombine.high %v537, %v537
        %v560 = vcombine.high %v544, %v544
        %v561 = vcombine.high %v551, %v551
        %v562 = vcombine.high %v558, %v558
        %v563 = vlaneseq
        %v564 = vshrl.u32 %v563, 7
        %v565 = vsub.s32 0, %v564
        %v566 = vrot.slane %v470, %v565
        %v567 = vlaneseq
        %v568 = vshrl.u32 %v567, 7
        %v569 = vsub.s32 1, %v568
        %v570 = vrot.slane %v470, %v569
        %v571 = vlaneseq
        %v572 = vshrl.u32 %v571, 7
        %v573 = vsub.s32 2, %v572
        %v574 = vrot.slane %v470, %v573
        %v575 = vlaneseq
        %v576 = vshrl.u32 %v575, 7
        %v577 = vsub.s32 0, %v576
        %v578 = vrot.slane %v484, %v577
        %v579 = vlaneseq
        %v580 = vshrl.u32 %v579, 7
        %v581 = vsub.s32 1, %v580
        %v582 = vrot.slane %v484, %v581
        %v583 = vlaneseq
        %v584 = vshrl.u32 %v583, 7
        %v585 = vsub.s32 2, %v584
        %v586 = vrot.slane %v484, %v585
        %v587 = vlaneseq
        %v588 = vshrl.u32 %v587, 7
        %v589 = vsub.s32 0, %v588
        %v590 = vrot.slane %v492, %v589
        %v591 = vlaneseq
        %v592 = vshrl.u32 %v591, 7
        %v593 = vsub.s32 1, %v592
        %v594 = vrot.slane %v492, %v593
        %v595 = vlaneseq
        %v596 = vshrl.u32 %v595, 7
        %v597 = vsub.s32 2, %v596
        %v598 = vrot.slane %v492, %v597
        %v599 = vlaneseq
        %v600 = vshrl.u32 %v599, 7
        %v601 = vsub.s32 0, %v600
        %v602 = vrot.slane %v494, %v601
        %v603 = vlaneseq
        %v604 = vshrl.u32 %v603, 7
        %v605 = vsub.s32 1, %v604
        %v606 = vrot.slane %v494, %v605
        %v607 = vlaneseq
        %v608 = vshrl.u32 %v607, 7
        %v609 = vsub.s32 2, %v608
        %v610 = vrot.slane %v494, %v609
        %v611 = vlaneseq
        %v612 = vshrl.u32 %v611, 7
        %v613 = vsub.s32 0, %v612
        %v614 = vrot.slane %v477, %v613
        %v615 = vlaneseq
        %v616 = vshrl.u32 %v615, 7
        %v617 = vsub.s32 1, %v616
        %v618 = vrot.slane %v477, %v617
        %v619 = vlaneseq
        %v620 = vshrl.u32 %v619, 7
        %v621 = vsub.s32 2, %v620
        %v622 = vrot.slane %v477, %v621
        %v623 = vlaneseq
        %v624 = vshrl.u32 %v623, 7
        %v625 = vsub.s32 0, %v624
        %v626 = vrot.slane %v491, %v625
        %v627 = vlaneseq
        %v628 = vshrl.u32 %v627, 7
        %v629 = vsub.s32 1, %v628
        %v630 = vrot.slane %v491, %v629
        %v631 = vlaneseq
        %v632 = vshrl.u32 %v631, 7
        %v633 = vsub.s32 2, %v632
        %v634 = vrot.slane %v491, %v633
        %v635 = vlaneseq
        %v636 = vshrl.u32 %v635, 7
        %v637 = vsub.s32 0, %v636
        %v638 = vrot.slane %v493, %v637
        %v639 = vlaneseq
        %v640 = vshrl.u32 %v639, 7
        %v641 = vsub.s32 1, %v640
        %v642 = vrot.slane %v493, %v641
        %v643 = vlaneseq
        %v644 = vshrl.u32 %v643, 7
        %v645 = vsub.s32 2, %v644
        %v646 = vrot.slane %v493, %v645
        %v647 = vlaneseq
        %v648 = vshrl.u32 %v647, 7
        %v649 = vsub.s32 0, %v648
        %v650 = vrot.slane %v495, %v649
        %v651 = vlaneseq
        %v652 = vshrl.u32 %v651, 7
        %v653 = vsub.s32 1, %v652
        %v654 = vrot.slane %v495, %v653
        %v655 = vlaneseq
        %v656 = vshrl.u32 %v655, 7
        %v657 = vsub.s32 2, %v656
        %v658 = vrot.slane %v495, %v657
        %v659 = vlaneseq
        %v660 = vshrl.u32 %v659, 7
        %v661 = vsub.s32 0, %v660
        %v662 = vrot.slane %v537, %v661
        %v663 = vlaneseq
        %v664 = vshrl.u32 %v663, 7
        %v665 = vsub.s32 1, %v664
        %v666 = vrot.slane %v537, %v665
        %v667 = vlaneseq
        %v668 = vshrl.u32 %v667, 7
        %v669 = vsub.s32 2, %v668
        %v670 = vrot.slane %v537, %v669
        %v671 = vlaneseq
        %v672 = vshrl.u32 %v671, 7
        %v673 = vsub.s32 0, %v672
        %v674 = vrot.slane %v551, %v673
        %v675 = vlaneseq
        %v676 = vshrl.u32 %v675, 7
        %v677 = vsub.s32 1, %v676
        %v678 = vrot.slane %v551, %v677
        %v679 = vlaneseq
        %v680 = vshrl.u32 %v679, 7
        %v681 = vsub.s32 2, %v680
        %v682 = vrot.slane %v551, %v681
        %v683 = vlaneseq
        %v684 = vshrl.u32 %v683, 7
        %v685 = vsub.s32 0, %v684
        %v686 = vrot.slane %v559, %v685
        %v687 = vlaneseq
        %v688 = vshrl.u32 %v687, 7
        %v689 = vsub.s32 1, %v688
        %v690 = vrot.slane %v559, %v689
        %v691 = vlaneseq
        %v692 = vshrl.u32 %v691, 7
        %v693 = vsub.s32 2, %v692
        %v694 = vrot.slane %v559, %v693
        %v695 = vlaneseq
        %v696 = vshrl.u32 %v695, 7
        %v697 = vsub.s32 0, %v696
        %v698 = vrot.slane %v561, %v697
        %v699 = vlaneseq
        %v700 = vshrl.u32 %v699, 7
        %v701 = vsub.s32 1, %v700
        %v702 = vrot.slane %v561, %v701
        %v703 = vlaneseq
        %v704 = vshrl.u32 %v703, 7
        %v705 = vsub.s32 2, %v704
        %v706 = vrot.slane %v561, %v705
        %v707 = vlaneseq
        %v708 = vshrl.u32 %v707, 7
        %v709 = vsub.s32 0, %v708
        %v710 = vrot.slane %v544, %v709
        %v711 = vlaneseq
        %v712 = vshrl.u32 %v711, 7
        %v713 = vsub.s32 1, %v712
        %v714 = vrot.slane %v544, %v713
        %v715 = vlaneseq
        %v716 = vshrl.u32 %v715, 7
        %v717 = vsub.s32 2, %v716
        %v718 = vrot.slane %v544, %v717
        %v719 = vlaneseq
        %v720 = vshrl.u32 %v719, 7
        %v721 = vsub.s32 0, %v720
        %v722 = vrot.slane %v558, %v721
        %v723 = vlaneseq
        %v724 = vshrl.u32 %v723, 7
        %v725 = vsub.s32 1, %v724
        %v726 = vrot.slane %v558, %v725
        %v727 = vlaneseq
        %v728 = vshrl.u32 %v727, 7
        %v729 = vsub.s32 2, %v728
        %v730 = vrot.slane %v558, %v729
        %v731 = vlaneseq
        %v732 = vshrl.u32 %v731, 7
        %v733 = vsub.s32 0, %v732
        %v734 = vrot.slane %v560, %v733
        %v735 = vlaneseq
        %v736 = vshrl.u32 %v735, 7
        %v737 = vsub.s32 1, %v736
        %v738 = vrot.slane %v560, %v737
        %v739 = vlaneseq
        %v740 = vshrl.u32 %v739, 7
        %v741 = vsub.s32 2, %v740
        %v742 = vrot.slane %v560, %v741
        %v743 = vlaneseq
        %v744 = vshrl.u32 %v743, 7
        %v745 = vsub.s32 0, %v744
        %v746 = vrot.slane %v562, %v745
        %v747 = vlaneseq
        %v748 = vshrl.u32 %v747, 7
        %v749 = vsub.s32 1, %v748
        %v750 = vrot.slane %v562, %v749
        %v751 = vlaneseq
        %v752 = vshrl.u32 %v751, 7
        %v753 = vsub.s32 2, %v752
        %v754 = vrot.slane %v562, %v753
        %v803 = vmul.f32 %v566, %v417
        %v804 = vmul.f32 %v570, %v418
        %v805 = vmul.f32 %v574, %v419
        %v806 = vmul.f32 %v566, %v420
        %v807 = vmul.f32 %v570, %v421
        %v808 = vmul.f32 %v574, %v422
        %v809 = vmul.f32 %v578, %v417
        %v810 = vmul.f32 %v582, %v418
        %v811 = vmul.f32 %v586, %v419
        %v812 = vmul.f32 %v578, %v420
        %v813 = vmul.f32 %v582, %v421
        %v814 = vmul.f32 %v586, %v422
        %v815 = vmul.f32 %v590, %v417
        %v816 = vmul.f32 %v594, %v418
        %v817 = vmul.f32 %v598, %v419
        %v818 = vmul.f32 %v590, %v420
        %v819 = vmul.f32 %v594, %v421
        %v820 = vmul.f32 %v598, %v422
        %v821 = vmul.f32 %v602, %v417
        %v822 = vmul.f32 %v606, %v418
        %v823 = vmul.f32 %v610, %v419
        %v824 = vmul.f32 %v602, %v420
        %v825 = vmul.f32 %v606, %v421
        %v826 = vmul.f32 %v610, %v422
        %v827 = vmul.f32 %v614, %v417
        %v828 = vmul.f32 %v618, %v418
        %v829 = vmul.f32 %v622, %v419
        %v830 = vmul.f32 %v614, %v420
        %v831 = vmul.f32 %v618, %v421
        %v832 = vmul.f32 %v622, %v422
        %v833 = vmul.f32 %v626, %v417
        %v834 = vmul.f32 %v630, %v418
        %v835 = vmul.f32 %v634, %v419
        %v836 = vmul.f32 %v626, %v420
        %v837 = vmul.f32 %v630, %v421
        %v838 = vmul.f32 %v634, %v422
        %v839 = vmul.f32 %v638, %v417
        %v840 = vmul.f32 %v642, %v418
        %v841 = vmul.f32 %v646, %v419
        %v842 = vmul.f32 %v638, %v420
        %v843 = vmul.f32 %v642, %v421
        %v844 = vmul.f32 %v646, %v422
        %v845 = vmul.f32 %v650, %v417
        %v846 = vmul.f32 %v654, %v418
        %v847 = vmul.f32 %v658, %v419
        %v848 = vmul.f32 %v650, %v420
        %v849 = vmul.f32 %v654, %v421
        %v850 = vmul.f32 %v658, %v422
        %v851 = vmul.f32 %v662, %v417
        %v852 = vmul.f32 %v666, %v418
        %v853 = vmul.f32 %v670, %v419
        %v854 = vmul.f32 %v662, %v420
        %v855 = vmul.f32 %v666, %v421
        %v856 = vmul.f32 %v670, %v422
        %v857 = vmul.f32 %v674, %v417
        %v858 = vmul.f32 %v678, %v418
        %v859 = vmul.f32 %v682, %v419
        %v860 = vmul.f32 %v674, %v420
        %v861 = vmul.f32 %v678, %v421
        %v862 = vmul.f32 %v682, %v422
        %v863 = vmul.f32 %v686, %v417
        %v864 = vmul.f32 %v690, %v418
        %v865 = vmul.f32 %v694, %v419
        %v866 = vmul.f32 %v686, %v420
        %v867 = vmul.f32 %v690, %v421
        %v868 = vmul.f32 %v694, %v422
        %v869 = vmul.f32 %v698, %v417
        %v870 = vmul.f32 %v702, %v418
        %v871 = vmul.f32 %v706, %v419
        %v872 = vmul.f32 %v698, %v420
        %v873 = vmul.f32 %v702, %v421
        %v874 = vmul.f32 %v706, %v422
        %v875 = vmul.f32 %v710, %v417
        %v876 = vmul.f32 %v714, %v418
        %v877 = vmul.f32 %v718, %v419
        %v878 = vmul.f32 %v710, %v420
        %v879 = vmul.f32 %v714, %v421
        %v880 = vmul.f32 %v718, %v422
        %v881 = vmul.f32 %v722, %v417
        %v882 = vmul.f32 %v726, %v418
        %v883 = vmul.f32 %v730, %v419
        %v884 = vmul.f32 %v722, %v420
        %v885 = vmul.f32 %v726, %v421
        %v886 = vmul.f32 %v730, %v422
        %v887 = vmul.f32 %v734, %v417
        %v888 = vmul.f32 %v738, %v418
        %v889 = vmul.f32 %v742, %v419
        %v890 = vmul.f32 %v734, %v420
        %v891 = vmul.f32 %v738, %v421
        %v892 = vmul.f32 %v742, %v422
        %v893 = vmul.f32 %v746, %v417
        %v894 = vmul.f32 %v750, %v418
        %v895 = vmul.f32 %v754, %v419
        %v896 = vmul.f32 %v746, %v420
        %v897 = vmul.f32 %v750, %v421
        %v898 = vmul.f32 %v754, %v422
        %v899 = vpack.c.bf16 %v806, %v803
        %v900 = vpack.c.bf16 %v807, %v804
        %v901 = vpack.c.bf16 %v808, %v805
        %v902 = vpack.c.bf16 %v812, %v809
        %v903 = vpack.c.bf16 %v813, %v810
        %v904 = vpack.c.bf16 %v814, %v811
        %v905 = vpack.c.bf16 %v818, %v815
        %v906 = vpack.c.bf16 %v819, %v816
        %v907 = vpack.c.bf16 %v820, %v817
        %v908 = vpack.c.bf16 %v824, %v821
        %v909 = vpack.c.bf16 %v825, %v822
        %v910 = vpack.c.bf16 %v826, %v823
        %v911 = vpack.c.bf16 %v830, %v827
        %v912 = vpack.c.bf16 %v831, %v828
        %v913 = vpack.c.bf16 %v832, %v829
        %v914 = vpack.c.bf16 %v836, %v833
        %v915 = vpack.c.bf16 %v837, %v834
        %v916 = vpack.c.bf16 %v838, %v835
        %v917 = vpack.c.bf16 %v842, %v839
        %v918 = vpack.c.bf16 %v843, %v840
        %v919 = vpack.c.bf16 %v844, %v841
        %v920 = vpack.c.bf16 %v848, %v845
        %v921 = vpack.c.bf16 %v849, %v846
        %v922 = vpack.c.bf16 %v850, %v847
        %v923 = vpack.c.bf16 %v854, %v851
        %v924 = vpack.c.bf16 %v855, %v852
        %v925 = vpack.c.bf16 %v856, %v853
        %v926 = vpack.c.bf16 %v860, %v857
        %v927 = vpack.c.bf16 %v861, %v858
        %v928 = vpack.c.bf16 %v862, %v859
        %v929 = vpack.c.bf16 %v866, %v863
        %v930 = vpack.c.bf16 %v867, %v864
        %v931 = vpack.c.bf16 %v868, %v865
        %v932 = vpack.c.bf16 %v872, %v869
        %v933 = vpack.c.bf16 %v873, %v870
        %v934 = vpack.c.bf16 %v874, %v871
        %v935 = vpack.c.bf16 %v878, %v875
        %v936 = vpack.c.bf16 %v879, %v876
        %v937 = vpack.c.bf16 %v880, %v877
        %v938 = vpack.c.bf16 %v884, %v881
        %v939 = vpack.c.bf16 %v885, %v882
        %v940 = vpack.c.bf16 %v886, %v883
        %v941 = vpack.c.bf16 %v890, %v887
        %v942 = vpack.c.bf16 %v891, %v888
        %v943 = vpack.c.bf16 %v892, %v889
        %v944 = vpack.c.bf16 %v896, %v893
        %v945 = vpack.c.bf16 %v897, %v894
        %v946 = vpack.c.bf16 %v898, %v895
        %v947 = vld [vmem:[%s257] sm:$0xff]
        %v948 = vld [vmem:[%s257 + $0x8] sm:$0xff]
        %v949 = vld [vmem:[%s257 + $0x10] sm:$0xff]
        %v950 = vld [vmem:[%s257 + $0x18] sm:$0xff]
        %v951 = vld [vmem:[%s257 + $0x20] sm:$0xff]
        %v952 = vld [vmem:[%s257 + $0x28] sm:$0xff]
        %v953 = vld [vmem:[%s257 + $0x30] sm:$0xff]
        %v954 = vld [vmem:[%s257 + $0x38] sm:$0xff]
        %v955 = vld [vmem:[%s257 + $0x40] sm:$0xff]
        %v956 = vld [vmem:[%s257 + $0x48] sm:$0xff]
        %v957 = vld [vmem:[%s257 + $0x50] sm:$0xff]
        %v958 = vld [vmem:[%s257 + $0x58] sm:$0xff]
        %v959 = vld [vmem:[%s257 + $0x60] sm:$0xff]
        %v960 = vld [vmem:[%s257 + $0x68] sm:$0xff]
        %v961 = vld [vmem:[%s257 + $0x70] sm:$0xff]
        %v962 = vld [vmem:[%s257 + $0x78] sm:$0xff]
        %v963 = vld [vmem:[%s257 + $0x80] sm:$0xff]
        %v964 = vld [vmem:[%s257 + $0x88] sm:$0xff]
        %v965 = vld [vmem:[%s257 + $0x90] sm:$0xff]
        %v966 = vld [vmem:[%s257 + $0x98] sm:$0xff]
        %v967 = vld [vmem:[%s257 + $0xa0] sm:$0xff]
        %v968 = vld [vmem:[%s257 + $0xa8] sm:$0xff]
        %v969 = vld [vmem:[%s257 + $0xb0] sm:$0xff]
        %v970 = vld [vmem:[%s257 + $0xb8] sm:$0xff]
        %v971 = vld [vmem:[%s257 + $0xc0] sm:$0xff]
        %v972 = vld [vmem:[%s257 + $0xc8] sm:$0xff]
        %v973 = vld [vmem:[%s257 + $0xd0] sm:$0xff]
        %v974 = vld [vmem:[%s257 + $0xd8] sm:$0xff]
        %v975 = vld [vmem:[%s257 + $0xe0] sm:$0xff]
        %v976 = vld [vmem:[%s257 + $0xe8] sm:$0xff]
        %v977 = vld [vmem:[%s257 + $0xf0] sm:$0xff]
        %v978 = vld [vmem:[%s257 + $0xf8] sm:$0xff]
        %v979 = vld [vmem:[%s3] sm:$0xff]
        %v980 = vld [vmem:[%s3 + $0x8] sm:$0xff]
        %v981 = vld [vmem:[%s3 + $0x10] sm:$0xff]
        %v982 = vld [vmem:[%s3 + $0x18] sm:$0xff]
        %v983 = vld [vmem:[%s3 + $0x20] sm:$0xff]
        %v984 = vld [vmem:[%s3 + $0x28] sm:$0xff]
        %v985 = vld [vmem:[%s3 + $0x30] sm:$0xff]
        %v986 = vld [vmem:[%s3 + $0x38] sm:$0xff]
        %v987 = vld [vmem:[%s3 + $0x40] sm:$0xff]
        %v988 = vld [vmem:[%s3 + $0x48] sm:$0xff]
        %v989 = vld [vmem:[%s3 + $0x50] sm:$0xff]
        %v990 = vld [vmem:[%s3 + $0x58] sm:$0xff]
        %v991 = vld [vmem:[%s3 + $0x60] sm:$0xff]
        %v992 = vld [vmem:[%s3 + $0x68] sm:$0xff]
        %v993 = vld [vmem:[%s3 + $0x70] sm:$0xff]
        %v994 = vld [vmem:[%s3 + $0x78] sm:$0xff]
        %v995 = vld [vmem:[%s3 + $0x80] sm:$0xff]
        %v996 = vld [vmem:[%s3 + $0x88] sm:$0xff]
        %v997 = vld [vmem:[%s3 + $0x90] sm:$0xff]
        %v998 = vld [vmem:[%s3 + $0x98] sm:$0xff]
        %v999 = vld [vmem:[%s3 + $0xa0] sm:$0xff]
        %v1000 = vld [vmem:[%s3 + $0xa8] sm:$0xff]
        %v1001 = vld [vmem:[%s3 + $0xb0] sm:$0xff]
        %v1002 = vld [vmem:[%s3 + $0xb8] sm:$0xff]
        %v1003 = vld [vmem:[%s3 + $0xc0] sm:$0xff]
        %v1004 = vld [vmem:[%s3 + $0xc8] sm:$0xff]
        %v1005 = vld [vmem:[%s3 + $0xd0] sm:$0xff]
        %v1006 = vld [vmem:[%s3 + $0xd8] sm:$0xff]
        %v1007 = vld [vmem:[%s3 + $0xe0] sm:$0xff]
        %v1008 = vld [vmem:[%s3 + $0xe8] sm:$0xff]
        %v1009 = vld [vmem:[%s3 + $0xf0] sm:$0xff]
        %v1010 = vld [vmem:[%s3 + $0xf8] sm:$0xff]
        %1012 = vset.pattern.permute.xlu0 0
        %1013 = vperm.xlu0 %1012, %v979
        %v1014 = vpop.permute.xlu0 %1013
        %1017 = vset.pattern.permute.xlu0 0
        %1018 = vperm.xlu0 %1017, %v980
        %v1019 = vpop.permute.xlu0 %1018
        %1022 = vset.pattern.permute.xlu0 0
        %1023 = vperm.xlu0 %1022, %v981
        %v1024 = vpop.permute.xlu0 %1023
        %1027 = vset.pattern.permute.xlu0 0
        %1028 = vperm.xlu0 %1027, %v982
        %v1029 = vpop.permute.xlu0 %1028
        %1032 = vset.pattern.permute.xlu0 0
        %1033 = vperm.xlu0 %1032, %v983
        %v1034 = vpop.permute.xlu0 %1033
        %1037 = vset.pattern.permute.xlu0 0
        %1038 = vperm.xlu0 %1037, %v984
        %v1039 = vpop.permute.xlu0 %1038
        %1042 = vset.pattern.permute.xlu0 0
        %1043 = vperm.xlu0 %1042, %v985
        %v1044 = vpop.permute.xlu0 %1043
        %1047 = vset.pattern.permute.xlu0 0
        %1048 = vperm.xlu0 %1047, %v986
        %v1049 = vpop.permute.xlu0 %1048
        %1052 = vset.pattern.permute.xlu0 0
        %1053 = vperm.xlu0 %1052, %v987
        %v1054 = vpop.permute.xlu0 %1053
        %1057 = vset.pattern.permute.xlu0 0
        %1058 = vperm.xlu0 %1057, %v988
        %v1059 = vpop.permute.xlu0 %1058
        %1062 = vset.pattern.permute.xlu0 0
        %1063 = vperm.xlu0 %1062, %v989
        %v1064 = vpop.permute.xlu0 %1063
        %1067 = vset.pattern.permute.xlu0 0
        %1068 = vperm.xlu0 %1067, %v990
        %v1069 = vpop.permute.xlu0 %1068
        %1072 = vset.pattern.permute.xlu0 0
        %1073 = vperm.xlu0 %1072, %v991
        %v1074 = vpop.permute.xlu0 %1073
        %1077 = vset.pattern.permute.xlu0 0
        %1078 = vperm.xlu0 %1077, %v992
        %v1079 = vpop.permute.xlu0 %1078
        %1082 = vset.pattern.permute.xlu0 0
        %1083 = vperm.xlu0 %1082, %v993
        %v1084 = vpop.permute.xlu0 %1083
        %1087 = vset.pattern.permute.xlu0 0
        %1088 = vperm.xlu0 %1087, %v994
        %v1089 = vpop.permute.xlu0 %1088
        %1092 = vset.pattern.permute.xlu0 0
        %1093 = vperm.xlu0 %1092, %v995
        %v1094 = vpop.permute.xlu0 %1093
        %1097 = vset.pattern.permute.xlu0 0
        %1098 = vperm.xlu0 %1097, %v996
        %v1099 = vpop.permute.xlu0 %1098
        %1102 = vset.pattern.permute.xlu0 0
        %1103 = vperm.xlu0 %1102, %v997
        %v1104 = vpop.permute.xlu0 %1103
        %1107 = vset.pattern.permute.xlu0 0
        %1108 = vperm.xlu0 %1107, %v998
        %v1109 = vpop.permute.xlu0 %1108
        %1112 = vset.pattern.permute.xlu0 0
        %1113 = vperm.xlu0 %1112, %v999
        %v1114 = vpop.permute.xlu0 %1113
        %1117 = vset.pattern.permute.xlu0 0
        %1118 = vperm.xlu0 %1117, %v1000
        %v1119 = vpop.permute.xlu0 %1118
        %1122 = vset.pattern.permute.xlu0 0
        %1123 = vperm.xlu0 %1122, %v1001
        %v1124 = vpop.permute.xlu0 %1123
        %1127 = vset.pattern.permute.xlu0 0
        %1128 = vperm.xlu0 %1127, %v1002
        %v1129 = vpop.permute.xlu0 %1128
        %1132 = vset.pattern.permute.xlu0 0
        %1133 = vperm.xlu0 %1132, %v1003
        %v1134 = vpop.permute.xlu0 %1133
        %1137 = vset.pattern.permute.xlu0 0
        %1138 = vperm.xlu0 %1137, %v1004
        %v1139 = vpop.permute.xlu0 %1138
        %1142 = vset.pattern.permute.xlu0 0
        %1143 = vperm.xlu0 %1142, %v1005
        %v1144 = vpop.permute.xlu0 %1143
        %1147 = vset.pattern.permute.xlu0 0
        %1148 = vperm.xlu0 %1147, %v1006
        %v1149 = vpop.permute.xlu0 %1148
        %1152 = vset.pattern.permute.xlu0 0
        %1153 = vperm.xlu0 %1152, %v1007
        %v1154 = vpop.permute.xlu0 %1153
        %1157 = vset.pattern.permute.xlu0 0
        %1158 = vperm.xlu0 %1157, %v1008
        %v1159 = vpop.permute.xlu0 %1158
        %1162 = vset.pattern.permute.xlu0 0
        %1163 = vperm.xlu0 %1162, %v1009
        %v1164 = vpop.permute.xlu0 %1163
        %1167 = vset.pattern.permute.xlu0 0
        %1168 = vperm.xlu0 %1167, %v1010
        %v1169 = vpop.permute.xlu0 %1168
        %v1203 = vunpack.c.l.b16 %v947
        %v1204 = vunpack.c.h.b16 %v947
        %v1205 = vunpack.c.l.b16 %v948
        %v1206 = vunpack.c.h.b16 %v948
        %v1207 = vunpack.c.l.b16 %v949
        %v1208 = vunpack.c.h.b16 %v949
        %v1209 = vunpack.c.l.b16 %v950
        %v1210 = vunpack.c.h.b16 %v950
        %v1211 = vunpack.c.l.b16 %v951
        %v1212 = vunpack.c.h.b16 %v951
        %v1213 = vunpack.c.l.b16 %v952
        %v1214 = vunpack.c.h.b16 %v952
        %v1215 = vunpack.c.l.b16 %v953
        %v1216 = vunpack.c.h.b16 %v953
        %v1217 = vunpack.c.l.b16 %v954
        %v1218 = vunpack.c.h.b16 %v954
        %v1219 = vunpack.c.l.b16 %v955
        %v1220 = vunpack.c.h.b16 %v955
        %v1221 = vunpack.c.l.b16 %v956
        %v1222 = vunpack.c.h.b16 %v956
        %v1223 = vunpack.c.l.b16 %v957
        %v1224 = vunpack.c.h.b16 %v957
        %v1225 = vunpack.c.l.b16 %v958
        %v1226 = vunpack.c.h.b16 %v958
        %v1227 = vunpack.c.l.b16 %v959
        %v1228 = vunpack.c.h.b16 %v959
        %v1229 = vunpack.c.l.b16 %v960
        %v1230 = vunpack.c.h.b16 %v960
        %v1231 = vunpack.c.l.b16 %v961
        %v1232 = vunpack.c.h.b16 %v961
        %v1233 = vunpack.c.l.b16 %v962
        %v1234 = vunpack.c.h.b16 %v962
        %v1235 = vunpack.c.l.b16 %v963
        %v1236 = vunpack.c.h.b16 %v963
        %v1237 = vunpack.c.l.b16 %v964
        %v1238 = vunpack.c.h.b16 %v964
        %v1239 = vunpack.c.l.b16 %v965
        %v1240 = vunpack.c.h.b16 %v965
        %v1241 = vunpack.c.l.b16 %v966
        %v1242 = vunpack.c.h.b16 %v966
        %v1243 = vunpack.c.l.b16 %v967
        %v1244 = vunpack.c.h.b16 %v967
        %v1245 = vunpack.c.l.b16 %v968
        %v1246 = vunpack.c.h.b16 %v968
        %v1247 = vunpack.c.l.b16 %v969
        %v1248 = vunpack.c.h.b16 %v969
        %v1249 = vunpack.c.l.b16 %v970
        %v1250 = vunpack.c.h.b16 %v970
        %v1251 = vunpack.c.l.b16 %v971
        %v1252 = vunpack.c.h.b16 %v971
        %v1253 = vunpack.c.l.b16 %v972
        %v1254 = vunpack.c.h.b16 %v972
        %v1255 = vunpack.c.l.b16 %v973
        %v1256 = vunpack.c.h.b16 %v973
        %v1257 = vunpack.c.l.b16 %v974
        %v1258 = vunpack.c.h.b16 %v974
        %v1259 = vunpack.c.l.b16 %v975
        %v1260 = vunpack.c.h.b16 %v975
        %v1261 = vunpack.c.l.b16 %v976
        %v1262 = vunpack.c.h.b16 %v976
        %v1263 = vunpack.c.l.b16 %v977
        %v1264 = vunpack.c.h.b16 %v977
        %v1265 = vunpack.c.l.b16 %v978
        %v1266 = vunpack.c.h.b16 %v978
        %v1267 = vpack.c.b16 %v1205, %v1203
        %v1268 = vpack.c.b16 %v1206, %v1204
        %v1269 = vpack.c.b16 %v1209, %v1207
        %v1270 = vpack.c.b16 %v1210, %v1208
        %v1271 = vpack.c.b16 %v1213, %v1211
        %v1272 = vpack.c.b16 %v1214, %v1212
        %v1273 = vpack.c.b16 %v1217, %v1215
        %v1274 = vpack.c.b16 %v1218, %v1216
        %v1275 = vpack.c.b16 %v1221, %v1219
        %v1276 = vpack.c.b16 %v1222, %v1220
        %v1277 = vpack.c.b16 %v1225, %v1223
        %v1278 = vpack.c.b16 %v1226, %v1224
        %v1279 = vpack.c.b16 %v1229, %v1227
        %v1280 = vpack.c.b16 %v1230, %v1228
        %v1281 = vpack.c.b16 %v1233, %v1231
        %v1282 = vpack.c.b16 %v1234, %v1232
        %v1283 = vpack.c.b16 %v1237, %v1235
        %v1284 = vpack.c.b16 %v1238, %v1236
        %v1285 = vpack.c.b16 %v1241, %v1239
        %v1286 = vpack.c.b16 %v1242, %v1240
        %v1287 = vpack.c.b16 %v1245, %v1243
        %v1288 = vpack.c.b16 %v1246, %v1244
        %v1289 = vpack.c.b16 %v1249, %v1247
        %v1290 = vpack.c.b16 %v1250, %v1248
        %v1291 = vpack.c.b16 %v1253, %v1251
        %v1292 = vpack.c.b16 %v1254, %v1252
        %v1293 = vpack.c.b16 %v1257, %v1255
        %v1294 = vpack.c.b16 %v1258, %v1256
        %v1295 = vpack.c.b16 %v1261, %v1259
        %v1296 = vpack.c.b16 %v1262, %v1260
        %v1297 = vpack.c.b16 %v1265, %v1263
        %v1298 = vpack.c.b16 %v1266, %v1264
        %1331 = vmatprep.subr.bf16.mxu0 %v900
        %1332 = vmatpush1.bf16.msra.mxu0 %v899
        %1333 = vmatprep.subr.bf16.mxu0 %v903
        %1334 = vmatpush1.bf16.msra.mxu0 %v902
        %1335 = vmatprep.subr.bf16.mxu0 %v906
        %1336 = vmatpush1.bf16.msra.mxu0 %v905
        %1337 = vmatprep.subr.bf16.mxu0 %v909
        %1338 = vmatpush1.bf16.msra.mxu0 %v908
        %1339 = vmatprep.subr.bf16.mxu0 %v912
        %1340 = vmatpush1.bf16.msra.mxu0 %v911
        %1341 = vmatprep.subr.bf16.mxu0 %v915
        %1342 = vmatpush1.bf16.msra.mxu0 %v914
        %1343 = vmatprep.subr.bf16.mxu0 %v918
        %1344 = vmatpush1.bf16.msra.mxu0 %v917
        %1345 = vmatprep.subr.bf16.mxu0 %v921
        %1346 = vmatpush1.bf16.msra.mxu0 %v920
        %1347 = vmatprep.subr.bf16.mxu0 %v924
        %1348 = vmatpush1.bf16.msra.mxu0 %v923
        %1349 = vmatprep.subr.bf16.mxu0 %v927
        %1350 = vmatpush1.bf16.msra.mxu0 %v926
        %1351 = vmatprep.subr.bf16.mxu0 %v930
        %1352 = vmatpush1.bf16.msra.mxu0 %v929
        %1353 = vmatprep.subr.bf16.mxu0 %v933
        %1354 = vmatpush1.bf16.msra.mxu0 %v932
        %1355 = vmatprep.subr.bf16.mxu0 %v936
        %1356 = vmatpush1.bf16.msra.mxu0 %v935
        %1357 = vmatprep.subr.bf16.mxu0 %v939
        %1358 = vmatpush1.bf16.msra.mxu0 %v938
        %1359 = vmatprep.subr.bf16.mxu0 %v942
        %1360 = vmatpush1.bf16.msra.mxu0 %v941
        %1361 = vmatprep.subr.bf16.mxu0 %v945
        %1362 = vmatpush1.bf16.msra.mxu0 %v944
        %1363 = vmatprep.mubr.bf16.mxu0 %v1268
        %1364 = vmatmul.mubr.bf16.gmra.mrb[0].mxu0 %v1267
        %v1365 = vpop.f32.mrb[0].mxu0
        %v1366 = vadd.f32 %v1014, %v1365
        %v1367 = vpop.f32.mrb[0].mxu0
        %v1368 = vadd.f32 %v1014, %v1367
        %v1369 = vpop.f32.mrb[0].mxu0
        %v1370 = vadd.f32 %v1019, %v1369
        %v1371 = vpop.f32.mrb[0].mxu0
        %v1372 = vadd.f32 %v1019, %v1371
        %1373 = vmatprep.mubr.bf16.mxu0 %v1270
        %1374 = vmatmul.mubr.bf16.gmra.mrb[0].mxu0 %v1269
        %v1375 = vpop.f32.mrb[0].mxu0
        %v1376 = vadd.f32 %v1024, %v1375
        %v1377 = vpop.f32.mrb[0].mxu0
        %v1378 = vadd.f32 %v1024, %v1377
        %v1379 = vpop.f32.mrb[0].mxu0
        %v1380 = vadd.f32 %v1029, %v1379
        %v1381 = vpop.f32.mrb[0].mxu0
        %v1382 = vadd.f32 %v1029, %v1381
        %1383 = vmatprep.mubr.bf16.mxu0 %v1272
        %1384 = vmatmul.mubr.bf16.gmra.mrb[0].mxu0 %v1271
        %v1385 = vpop.f32.mrb[0].mxu0
        %v1386 = vadd.f32 %v1034, %v1385
        %v1387 = vpop.f32.mrb[0].mxu0
        %v1388 = vadd.f32 %v1034, %v1387
        %v1389 = vpop.f32.mrb[0].mxu0
        %v1390 = vadd.f32 %v1039, %v1389
        %v1391 = vpop.f32.mrb[0].mxu0
        %v1392 = vadd.f32 %v1039, %v1391
        %1393 = vmatprep.mubr.bf16.mxu0 %v1274
        %1394 = vmatmul.mubr.bf16.gmra.mrb[0].mxu0 %v1273
        %v1395 = vpop.f32.mrb[0].mxu0
        %v1396 = vadd.f32 %v1044, %v1395
        %v1397 = vpop.f32.mrb[0].mxu0
        %v1398 = vadd.f32 %v1044, %v1397
        %v1399 = vpop.f32.mrb[0].mxu0
        %v1400 = vadd.f32 %v1049, %v1399
        %v1401 = vpop.f32.mrb[0].mxu0
        %v1402 = vadd.f32 %v1049, %v1401
        %1403 = vmatprep.mubr.bf16.mxu0 %v1276
        %1404 = vmatmul.mubr.bf16.gmra.mrb[0].mxu0 %v1275
        %v1405 = vpop.f32.mrb[0].mxu0
        %v1406 = vadd.f32 %v1054, %v1405
        %v1407 = vpop.f32.mrb[0].mxu0
        %v1408 = vadd.f32 %v1054, %v1407
        %v1409 = vpop.f32.mrb[0].mxu0
        %v1410 = vadd.f32 %v1059, %v1409
        %v1411 = vpop.f32.mrb[0].mxu0
        %v1412 = vadd.f32 %v1059, %v1411
        %1413 = vmatprep.mubr.bf16.mxu0 %v1278
        %1414 = vmatmul.mubr.bf16.gmra.mrb[0].mxu0 %v1277
        %v1415 = vpop.f32.mrb[0].mxu0
        %v1416 = vadd.f32 %v1064, %v1415
        %v1417 = vpop.f32.mrb[0].mxu0
        %v1418 = vadd.f32 %v1064, %v1417
        %v1419 = vpop.f32.mrb[0].mxu0
        %v1420 = vadd.f32 %v1069, %v1419
        %v1421 = vpop.f32.mrb[0].mxu0
        %v1422 = vadd.f32 %v1069, %v1421
        %1423 = vmatprep.mubr.bf16.mxu0 %v1280
        %1424 = vmatmul.mubr.bf16.gmra.mrb[0].mxu0 %v1279
        %v1425 = vpop.f32.mrb[0].mxu0
        %v1426 = vadd.f32 %v1074, %v1425
        %v1427 = vpop.f32.mrb[0].mxu0
        %v1428 = vadd.f32 %v1074, %v1427
        %v1429 = vpop.f32.mrb[0].mxu0
        %v1430 = vadd.f32 %v1079, %v1429
        %v1431 = vpop.f32.mrb[0].mxu0
        %v1432 = vadd.f32 %v1079, %v1431
        %1433 = vmatprep.mubr.bf16.mxu0 %v1282
        %1434 = vmatmul.mubr.bf16.gmra.mrb[0].mxu0 %v1281
        %v1435 = vpop.f32.mrb[0].mxu0
        %v1436 = vadd.f32 %v1084, %v1435
        %v1437 = vpop.f32.mrb[0].mxu0
        %v1438 = vadd.f32 %v1084, %v1437
        %v1439 = vpop.f32.mrb[0].mxu0
        %v1440 = vadd.f32 %v1089, %v1439
        %v1441 = vpop.f32.mrb[0].mxu0
        %v1442 = vadd.f32 %v1089, %v1441
        %1443 = vmatprep.mubr.bf16.mxu0 %v1284
        %1444 = vmatmul.mubr.bf16.gmra.mrb[0].mxu0 %v1283
        %v1445 = vpop.f32.mrb[0].mxu0
        %v1446 = vadd.f32 %v1094, %v1445
        %v1447 = vpop.f32.mrb[0].mxu0
        %v1448 = vadd.f32 %v1094, %v1447
        %v1449 = vpop.f32.mrb[0].mxu0
        %v1450 = vadd.f32 %v1099, %v1449
        %v1451 = vpop.f32.mrb[0].mxu0
        %v1452 = vadd.f32 %v1099, %v1451
        %1453 = vmatprep.mubr.bf16.mxu0 %v1286
        %1454 = vmatmul.mubr.bf16.gmra.mrb[0].mxu0 %v1285
        %v1455 = vpop.f32.mrb[0].mxu0
        %v1456 = vadd.f32 %v1104, %v1455
        %v1457 = vpop.f32.mrb[0].mxu0
        %v1458 = vadd.f32 %v1104, %v1457
        %v1459 = vpop.f32.mrb[0].mxu0
        %v1460 = vadd.f32 %v1109, %v1459
        %v1461 = vpop.f32.mrb[0].mxu0
        %v1462 = vadd.f32 %v1109, %v1461
        %1463 = vmatprep.mubr.bf16.mxu0 %v1288
        %1464 = vmatmul.mubr.bf16.gmra.mrb[0].mxu0 %v1287
        %v1465 = vpop.f32.mrb[0].mxu0
        %v1466 = vadd.f32 %v1114, %v1465
        %v1467 = vpop.f32.mrb[0].mxu0
        %v1468 = vadd.f32 %v1114, %v1467
        %v1469 = vpop.f32.mrb[0].mxu0
        %v1470 = vadd.f32 %v1119, %v1469
        %v1471 = vpop.f32.mrb[0].mxu0
        %v1472 = vadd.f32 %v1119, %v1471
        %1473 = vmatprep.mubr.bf16.mxu0 %v1290
        %1474 = vmatmul.mubr.bf16.gmra.mrb[0].mxu0 %v1289
        %v1475 = vpop.f32.mrb[0].mxu0
        %v1476 = vadd.f32 %v1124, %v1475
        %v1477 = vpop.f32.mrb[0].mxu0
        %v1478 = vadd.f32 %v1124, %v1477
        %v1479 = vpop.f32.mrb[0].mxu0
        %v1480 = vadd.f32 %v1129, %v1479
        %v1481 = vpop.f32.mrb[0].mxu0
        %v1482 = vadd.f32 %v1129, %v1481
        %1483 = vmatprep.mubr.bf16.mxu0 %v1292
        %1484 = vmatmul.mubr.bf16.gmra.mrb[0].mxu0 %v1291
        %v1485 = vpop.f32.mrb[0].mxu0
        %v1486 = vadd.f32 %v1134, %v1485
        %v1487 = vpop.f32.mrb[0].mxu0
        %v1488 = vadd.f32 %v1134, %v1487
        %v1489 = vpop.f32.mrb[0].mxu0
        %v1490 = vadd.f32 %v1139, %v1489
        %v1491 = vpop.f32.mrb[0].mxu0
        %v1492 = vadd.f32 %v1139, %v1491
        %1493 = vmatprep.mubr.bf16.mxu0 %v1294
        %1494 = vmatmul.mubr.bf16.gmra.mrb[0].mxu0 %v1293
        %v1495 = vpop.f32.mrb[0].mxu0
        %v1496 = vadd.f32 %v1144, %v1495
        %v1497 = vpop.f32.mrb[0].mxu0
        %v1498 = vadd.f32 %v1144, %v1497
        %v1499 = vpop.f32.mrb[0].mxu0
        %v1500 = vadd.f32 %v1149, %v1499
        %v1501 = vpop.f32.mrb[0].mxu0
        %v1502 = vadd.f32 %v1149, %v1501
        %1503 = vmatprep.mubr.bf16.mxu0 %v1296
        %1504 = vmatmul.mubr.bf16.gmra.mrb[0].mxu0 %v1295
        %v1505 = vpop.f32.mrb[0].mxu0
        %v1506 = vadd.f32 %v1154, %v1505
        %v1507 = vpop.f32.mrb[0].mxu0
        %v1508 = vadd.f32 %v1154, %v1507
        %v1509 = vpop.f32.mrb[0].mxu0
        %v1510 = vadd.f32 %v1159, %v1509
        %v1511 = vpop.f32.mrb[0].mxu0
        %v1512 = vadd.f32 %v1159, %v1511
        %1513 = vmatprep.mubr.bf16.mxu0 %v1298
        %1514 = vmatmul.mubr.bf16.gmra.mrb[0].mxu0 %v1297
        %v1515 = vpop.f32.mrb[0].mxu0
        %v1516 = vadd.f32 %v1164, %v1515
        %v1517 = vpop.f32.mrb[0].mxu0
        %v1518 = vadd.f32 %v1164, %v1517
        %v1519 = vpop.f32.mrb[0].mxu0
        %v1520 = vadd.f32 %v1169, %v1519
        %v1521 = vpop.f32.mrb[0].mxu0
        %v1522 = vadd.f32 %v1169, %v1521
        %1523 = vdwg.mxu0
        %1524 = vmatprep.subr.bf16.mxu0 0
        %1525 = vmatpush1.bf16.msra.mxu0 %v901
        %1526 = vmatprep.subr.bf16.mxu0 0
        %1527 = vmatpush1.bf16.msra.mxu0 %v904
        %1528 = vmatprep.subr.bf16.mxu0 0
        %1529 = vmatpush1.bf16.msra.mxu0 %v907
        %1530 = vmatprep.subr.bf16.mxu0 0
        %1531 = vmatpush1.bf16.msra.mxu0 %v910
        %1532 = vmatprep.subr.bf16.mxu0 0
        %1533 = vmatpush1.bf16.msra.mxu0 %v913
        %1534 = vmatprep.subr.bf16.mxu0 0
        %1535 = vmatpush1.bf16.msra.mxu0 %v916
        %1536 = vmatprep.subr.bf16.mxu0 0
        %1537 = vmatpush1.bf16.msra.mxu0 %v919
        %1538 = vmatprep.subr.bf16.mxu0 0
        %1539 = vmatpush1.bf16.msra.mxu0 %v922
        %1540 = vmatprep.subr.bf16.mxu0 0
        %1541 = vmatpush1.bf16.msra.mxu0 %v925
        %1542 = vmatprep.subr.bf16.mxu0 0
        %1543 = vmatpush1.bf16.msra.mxu0 %v928
        %1544 = vmatprep.subr.bf16.mxu0 0
        %1545 = vmatpush1.bf16.msra.mxu0 %v931
        %1546 = vmatprep.subr.bf16.mxu0 0
        %1547 = vmatpush1.bf16.msra.mxu0 %v934
        %1548 = vmatprep.subr.bf16.mxu0 0
        %1549 = vmatpush1.bf16.msra.mxu0 %v937
        %1550 = vmatprep.subr.bf16.mxu0 0
        %1551 = vmatpush1.bf16.msra.mxu0 %v940
        %1552 = vmatprep.subr.bf16.mxu0 0
        %1553 = vmatpush1.bf16.msra.mxu0 %v943
        %1554 = vmatprep.subr.bf16.mxu0 0
        %1555 = vmatpush1.bf16.msra.mxu0 %v946
        %1556 = vmatprep.mubr.bf16.mxu0 %v1268
        %1557 = vmatmul.mubr.bf16.gmra.mrb[0].mxu0 %v1267
        %v1558 = vpop.f32.mrb[0].mxu0
        %v1559 = vadd.f32 %v1014, %v1558
        %v1560 = vpop.f32.mrb[0].mxu0
        %v1561 = vpop.f32.mrb[0].mxu0
        %v1562 = vadd.f32 %v1019, %v1561
        %v1563 = vpop.f32.mrb[0].mxu0
        %1564 = vmatprep.mubr.bf16.mxu0 %v1270
        %1565 = vmatmul.mubr.bf16.gmra.mrb[0].mxu0 %v1269
        %v1566 = vpop.f32.mrb[0].mxu0
        %v1567 = vadd.f32 %v1024, %v1566
        %v1568 = vpop.f32.mrb[0].mxu0
        %v1569 = vpop.f32.mrb[0].mxu0
        %v1570 = vadd.f32 %v1029, %v1569
        %v1571 = vpop.f32.mrb[0].mxu0
        %1572 = vmatprep.mubr.bf16.mxu0 %v1272
        %1573 = vmatmul.mubr.bf16.gmra.mrb[0].mxu0 %v1271
        %v1574 = vpop.f32.mrb[0].mxu0
        %v1575 = vadd.f32 %v1034, %v1574
        %v1576 = vpop.f32.mrb[0].mxu0
        %v1577 = vpop.f32.mrb[0].mxu0
        %v1578 = vadd.f32 %v1039, %v1577
        %v1579 = vpop.f32.mrb[0].mxu0
        %1580 = vmatprep.mubr.bf16.mxu0 %v1274
        %1581 = vmatmul.mubr.bf16.gmra.mrb[0].mxu0 %v1273
        %v1582 = vpop.f32.mrb[0].mxu0
        %v1583 = vadd.f32 %v1044, %v1582
        %v1584 = vpop.f32.mrb[0].mxu0
        %v1585 = vpop.f32.mrb[0].mxu0
        %v1586 = vadd.f32 %v1049, %v1585
        %v1587 = vpop.f32.mrb[0].mxu0
        %1588 = vmatprep.mubr.bf16.mxu0 %v1276
        %1589 = vmatmul.mubr.bf16.gmra.mrb[0].mxu0 %v1275
        %v1590 = vpop.f32.mrb[0].mxu0
        %v1591 = vadd.f32 %v1054, %v1590
        %v1592 = vpop.f32.mrb[0].mxu0
        %v1593 = vpop.f32.mrb[0].mxu0
        %v1594 = vadd.f32 %v1059, %v1593
        %v1595 = vpop.f32.mrb[0].mxu0
        %1596 = vmatprep.mubr.bf16.mxu0 %v1278
        %1597 = vmatmul.mubr.bf16.gmra.mrb[0].mxu0 %v1277
        %v1598 = vpop.f32.mrb[0].mxu0
        %v1599 = vadd.f32 %v1064, %v1598
        %v1600 = vpop.f32.mrb[0].mxu0
        %v1601 = vpop.f32.mrb[0].mxu0
        %v1602 = vadd.f32 %v1069, %v1601
        %v1603 = vpop.f32.mrb[0].mxu0
        %1604 = vmatprep.mubr.bf16.mxu0 %v1280
        %1605 = vmatmul.mubr.bf16.gmra.mrb[0].mxu0 %v1279
        %v1606 = vpop.f32.mrb[0].mxu0
        %v1607 = vadd.f32 %v1074, %v1606
        %v1608 = vpop.f32.mrb[0].mxu0
        %v1609 = vpop.f32.mrb[0].mxu0
        %v1610 = vadd.f32 %v1079, %v1609
        %v1611 = vpop.f32.mrb[0].mxu0
        %1612 = vmatprep.mubr.bf16.mxu0 %v1282
        %1613 = vmatmul.mubr.bf16.gmra.mrb[0].mxu0 %v1281
        %v1614 = vpop.f32.mrb[0].mxu0
        %v1615 = vadd.f32 %v1084, %v1614
        %v1616 = vpop.f32.mrb[0].mxu0
        %v1617 = vpop.f32.mrb[0].mxu0
        %v1618 = vadd.f32 %v1089, %v1617
        %v1619 = vpop.f32.mrb[0].mxu0
        %1620 = vmatprep.mubr.bf16.mxu0 %v1284
        %1621 = vmatmul.mubr.bf16.gmra.mrb[0].mxu0 %v1283
        %v1622 = vpop.f32.mrb[0].mxu0
        %v1623 = vadd.f32 %v1094, %v1622
        %v1624 = vpop.f32.mrb[0].mxu0
        %v1625 = vpop.f32.mrb[0].mxu0
        %v1626 = vadd.f32 %v1099, %v1625
        %v1627 = vpop.f32.mrb[0].mxu0
        %1628 = vmatprep.mubr.bf16.mxu0 %v1286
        %1629 = vmatmul.mubr.bf16.gmra.mrb[0].mxu0 %v1285
        %v1630 = vpop.f32.mrb[0].mxu0
        %v1631 = vadd.f32 %v1104, %v1630
        %v1632 = vpop.f32.mrb[0].mxu0
        %v1633 = vpop.f32.mrb[0].mxu0
        %v1634 = vadd.f32 %v1109, %v1633
        %v1635 = vpop.f32.mrb[0].mxu0
        %1636 = vmatprep.mubr.bf16.mxu0 %v1288
        %1637 = vmatmul.mubr.bf16.gmra.mrb[0].mxu0 %v1287
        %v1638 = vpop.f32.mrb[0].mxu0
        %v1639 = vadd.f32 %v1114, %v1638
        %v1640 = vpop.f32.mrb[0].mxu0
        %v1641 = vpop.f32.mrb[0].mxu0
        %v1642 = vadd.f32 %v1119, %v1641
        %v1643 = vpop.f32.mrb[0].mxu0
        %1644 = vmatprep.mubr.bf16.mxu0 %v1290
        %1645 = vmatmul.mubr.bf16.gmra.mrb[0].mxu0 %v1289
        %v1646 = vpop.f32.mrb[0].mxu0
        %v1647 = vadd.f32 %v1124, %v1646
        %v1648 = vpop.f32.mrb[0].mxu0
        %v1649 = vpop.f32.mrb[0].mxu0
        %v1650 = vadd.f32 %v1129, %v1649
        %v1651 = vpop.f32.mrb[0].mxu0
        %1652 = vmatprep.mubr.bf16.mxu0 %v1292
        %1653 = vmatmul.mubr.bf16.gmra.mrb[0].mxu0 %v1291
        %v1654 = vpop.f32.mrb[0].mxu0
        %v1655 = vadd.f32 %v1134, %v1654
        %v1656 = vpop.f32.mrb[0].mxu0
        %v1657 = vpop.f32.mrb[0].mxu0
        %v1658 = vadd.f32 %v1139, %v1657
        %v1659 = vpop.f32.mrb[0].mxu0
        %1660 = vmatprep.mubr.bf16.mxu0 %v1294
        %1661 = vmatmul.mubr.bf16.gmra.mrb[0].mxu0 %v1293
        %v1662 = vpop.f32.mrb[0].mxu0
        %v1663 = vadd.f32 %v1144, %v1662
        %v1664 = vpop.f32.mrb[0].mxu0
        %v1665 = vpop.f32.mrb[0].mxu0
        %v1666 = vadd.f32 %v1149, %v1665
        %v1667 = vpop.f32.mrb[0].mxu0
        %1668 = vmatprep.mubr.bf16.mxu0 %v1296
        %1669 = vmatmul.mubr.bf16.gmra.mrb[0].mxu0 %v1295
        %v1670 = vpop.f32.mrb[0].mxu0
        %v1671 = vadd.f32 %v1154, %v1670
        %v1672 = vpop.f32.mrb[0].mxu0
        %v1673 = vpop.f32.mrb[0].mxu0
        %v1674 = vadd.f32 %v1159, %v1673
        %v1675 = vpop.f32.mrb[0].mxu0
        %1676 = vmatprep.mubr.bf16.mxu0 %v1298
        %1677 = vmatmul.mubr.bf16.gmra.mrb[0].mxu0 %v1297
        %v1678 = vpop.f32.mrb[0].mxu0
        %v1679 = vadd.f32 %v1164, %v1678
        %v1680 = vpop.f32.mrb[0].mxu0
        %v1681 = vpop.f32.mrb[0].mxu0
        %v1682 = vadd.f32 %v1169, %v1681
        %v1683 = vpop.f32.mrb[0].mxu0
        %1684 = vdwg.mxu0
        %v1685 = vmax.f32 %v1366, 0.0
        %v1686 = vmax.f32 %v1368, 0.0
        %v1687 = vmax.f32 %v1559, 0.0
        %v1688 = vmax.f32 %v1370, 0.0
        %v1689 = vmax.f32 %v1372, 0.0
        %v1690 = vmax.f32 %v1562, 0.0
        %v1691 = vmax.f32 %v1376, 0.0
        %v1692 = vmax.f32 %v1378, 0.0
        %v1693 = vmax.f32 %v1567, 0.0
        %v1694 = vmax.f32 %v1380, 0.0
        %v1695 = vmax.f32 %v1382, 0.0
        %v1696 = vmax.f32 %v1570, 0.0
        %v1697 = vmax.f32 %v1386, 0.0
        %v1698 = vmax.f32 %v1388, 0.0
        %v1699 = vmax.f32 %v1575, 0.0
        %v1700 = vmax.f32 %v1390, 0.0
        %v1701 = vmax.f32 %v1392, 0.0
        %v1702 = vmax.f32 %v1578, 0.0
        %v1703 = vmax.f32 %v1396, 0.0
        %v1704 = vmax.f32 %v1398, 0.0
        %v1705 = vmax.f32 %v1583, 0.0
        %v1706 = vmax.f32 %v1400, 0.0
        %v1707 = vmax.f32 %v1402, 0.0
        %v1708 = vmax.f32 %v1586, 0.0
        %v1709 = vmax.f32 %v1406, 0.0
        %v1710 = vmax.f32 %v1408, 0.0
        %v1711 = vmax.f32 %v1591, 0.0
        %v1712 = vmax.f32 %v1410, 0.0
        %v1713 = vmax.f32 %v1412, 0.0
        %v1714 = vmax.f32 %v1594, 0.0
        %v1715 = vmax.f32 %v1416, 0.0
        %v1716 = vmax.f32 %v1418, 0.0
        %v1717 = vmax.f32 %v1599, 0.0
        %v1718 = vmax.f32 %v1420, 0.0
        %v1719 = vmax.f32 %v1422, 0.0
        %v1720 = vmax.f32 %v1602, 0.0
        %v1721 = vmax.f32 %v1426, 0.0
        %v1722 = vmax.f32 %v1428, 0.0
        %v1723 = vmax.f32 %v1607, 0.0
        %v1724 = vmax.f32 %v1430, 0.0
        %v1725 = vmax.f32 %v1432, 0.0
        %v1726 = vmax.f32 %v1610, 0.0
        %v1727 = vmax.f32 %v1436, 0.0
        %v1728 = vmax.f32 %v1438, 0.0
        %v1729 = vmax.f32 %v1615, 0.0
        %v1730 = vmax.f32 %v1440, 0.0
        %v1731 = vmax.f32 %v1442, 0.0
        %v1732 = vmax.f32 %v1618, 0.0
        %v1733 = vmax.f32 %v1446, 0.0
        %v1734 = vmax.f32 %v1448, 0.0
        %v1735 = vmax.f32 %v1623, 0.0
        %v1736 = vmax.f32 %v1450, 0.0
        %v1737 = vmax.f32 %v1452, 0.0
        %v1738 = vmax.f32 %v1626, 0.0
        %v1739 = vmax.f32 %v1456, 0.0
        %v1740 = vmax.f32 %v1458, 0.0
        %v1741 = vmax.f32 %v1631, 0.0
        %v1742 = vmax.f32 %v1460, 0.0
        %v1743 = vmax.f32 %v1462, 0.0
        %v1744 = vmax.f32 %v1634, 0.0
        %v1745 = vmax.f32 %v1466, 0.0
        %v1746 = vmax.f32 %v1468, 0.0
        %v1747 = vmax.f32 %v1639, 0.0
        %v1748 = vmax.f32 %v1470, 0.0
        %v1749 = vmax.f32 %v1472, 0.0
        %v1750 = vmax.f32 %v1642, 0.0
        %v1751 = vmax.f32 %v1476, 0.0
        %v1752 = vmax.f32 %v1478, 0.0
        %v1753 = vmax.f32 %v1647, 0.0
        %v1754 = vmax.f32 %v1480, 0.0
        %v1755 = vmax.f32 %v1482, 0.0
        %v1756 = vmax.f32 %v1650, 0.0
        %v1757 = vmax.f32 %v1486, 0.0
        %v1758 = vmax.f32 %v1488, 0.0
        %v1759 = vmax.f32 %v1655, 0.0
        %v1760 = vmax.f32 %v1490, 0.0
        %v1761 = vmax.f32 %v1492, 0.0
        %v1762 = vmax.f32 %v1658, 0.0
        %v1763 = vmax.f32 %v1496, 0.0
        %v1764 = vmax.f32 %v1498, 0.0
        %v1765 = vmax.f32 %v1663, 0.0
        %v1766 = vmax.f32 %v1500, 0.0
        %v1767 = vmax.f32 %v1502, 0.0
        %v1768 = vmax.f32 %v1666, 0.0
        %v1769 = vmax.f32 %v1506, 0.0
        %v1770 = vmax.f32 %v1508, 0.0
        %v1771 = vmax.f32 %v1671, 0.0
        %v1772 = vmax.f32 %v1510, 0.0
        %v1773 = vmax.f32 %v1512, 0.0
        %v1774 = vmax.f32 %v1674, 0.0
        %v1775 = vmax.f32 %v1516, 0.0
        %v1776 = vmax.f32 %v1518, 0.0
        %v1777 = vmax.f32 %v1679, 0.0
        %v1778 = vmax.f32 %v1520, 0.0
        %v1779 = vmax.f32 %v1522, 0.0
        %v1780 = vmax.f32 %v1682, 0.0
        %v1781 = vld [vmem:[%s4] sm:$0x3]
        %v1782 = vpack.c.bf16 %v1688, %v1685
        %v1783 = vpack.c.bf16 %v1689, %v1686
        %v1784 = vpack.c.bf16 %v1690, %v1687
        %v1785 = vpack.c.bf16 %v1694, %v1691
        %v1786 = vpack.c.bf16 %v1695, %v1692
        %v1787 = vpack.c.bf16 %v1696, %v1693
        %v1788 = vpack.c.bf16 %v1700, %v1697
        %v1789 = vpack.c.bf16 %v1701, %v1698
        %v1790 = vpack.c.bf16 %v1702, %v1699
        %v1791 = vpack.c.bf16 %v1706, %v1703
        %v1792 = vpack.c.bf16 %v1707, %v1704
        %v1793 = vpack.c.bf16 %v1708, %v1705
        %v1794 = vpack.c.bf16 %v1712, %v1709
        %v1795 = vpack.c.bf16 %v1713, %v1710
        %v1796 = vpack.c.bf16 %v1714, %v1711
        %v1797 = vpack.c.bf16 %v1718, %v1715
        %v1798 = vpack.c.bf16 %v1719, %v1716
        %v1799 = vpack.c.bf16 %v1720, %v1717
        %v1800 = vpack.c.bf16 %v1724, %v1721
        %v1801 = vpack.c.bf16 %v1725, %v1722
        %v1802 = vpack.c.bf16 %v1726, %v1723
        %v1803 = vpack.c.bf16 %v1730, %v1727
        %v1804 = vpack.c.bf16 %v1731, %v1728
        %v1805 = vpack.c.bf16 %v1732, %v1729
        %v1806 = vpack.c.bf16 %v1736, %v1733
        %v1807 = vpack.c.bf16 %v1737, %v1734
        %v1808 = vpack.c.bf16 %v1738, %v1735
        %v1809 = vpack.c.bf16 %v1742, %v1739
        %v1810 = vpack.c.bf16 %v1743, %v1740
        %v1811 = vpack.c.bf16 %v1744, %v1741
        %v1812 = vpack.c.bf16 %v1748, %v1745
        %v1813 = vpack.c.bf16 %v1749, %v1746
        %v1814 = vpack.c.bf16 %v1750, %v1747
        %v1815 = vpack.c.bf16 %v1754, %v1751
        %v1816 = vpack.c.bf16 %v1755, %v1752
        %v1817 = vpack.c.bf16 %v1756, %v1753
        %v1818 = vpack.c.bf16 %v1760, %v1757
        %v1819 = vpack.c.bf16 %v1761, %v1758
        %v1820 = vpack.c.bf16 %v1762, %v1759
        %v1821 = vpack.c.bf16 %v1766, %v1763
        %v1822 = vpack.c.bf16 %v1767, %v1764
        %v1823 = vpack.c.bf16 %v1768, %v1765
        %v1824 = vpack.c.bf16 %v1772, %v1769
        %v1825 = vpack.c.bf16 %v1773, %v1770
        %v1826 = vpack.c.bf16 %v1774, %v1771
        %v1827 = vpack.c.bf16 %v1778, %v1775
        %v1828 = vpack.c.bf16 %v1779, %v1776
        %v1829 = vpack.c.bf16 %v1780, %v1777
        %v1830 = vld [vmem:[%s5] sm:$0x3]
        %1832 = vset.pattern.permute.xlu0 0
        %1833 = vperm.xlu0 %1832, %v1830
        %v1834 = vpop.permute.xlu0 %1833
        %v1838 = vunpack.c.l.s4 1966171168
        %v1839 = vunpack.c.0.s8 %v1838
        %v1840 = vlaneseq
        %v1841 = vshrl.u32 %v1840, 7
        %v1842 = vsub.s32 %v1839, %v1841
        %v1843 = vrot.slane %v1781, %v1842
        %v1844 = vcombine.high %v1843, %v1843
        %v1846 = vunpack.c.l.s4 1966171168
        %v1847 = vunpack.c.0.s8 %v1846
        %v1848 = vlaneseq
        %v1849 = vshrl.u32 %v1848, 7
        %v1850 = vsub.s32 %v1847, %v1849
        %v1851 = vrot.slane %v1843, %v1850
        %v1853 = vunpack.c.l.s4 1966171168
        %v1854 = vunpack.c.0.s8 %v1853
        %v1855 = vlaneseq
        %v1856 = vshrl.u32 %v1855, 7
        %v1857 = vsub.s32 %v1854, %v1856
        %v1858 = vrot.slane %v1844, %v1857
        %1861 = vmatprep.subr.bf16.mxu0 %v1783
        %1862 = vmatpush1.bf16.msra.mxu0 %v1782
        %1863 = vmatprep.subr.bf16.mxu0 %v1786
        %1864 = vmatpush1.bf16.msra.mxu0 %v1785
        %1865 = vmatprep.subr.bf16.mxu0 %v1789
        %1866 = vmatpush1.bf16.msra.mxu0 %v1788
        %1867 = vmatprep.subr.bf16.mxu0 %v1792
        %1868 = vmatpush1.bf16.msra.mxu0 %v1791
        %1869 = vmatprep.subr.bf16.mxu0 %v1795
        %1870 = vmatpush1.bf16.msra.mxu0 %v1794
        %1871 = vmatprep.subr.bf16.mxu0 %v1798
        %1872 = vmatpush1.bf16.msra.mxu0 %v1797
        %1873 = vmatprep.subr.bf16.mxu0 %v1801
        %1874 = vmatpush1.bf16.msra.mxu0 %v1800
        %1875 = vmatprep.subr.bf16.mxu0 %v1804
        %1876 = vmatpush1.bf16.msra.mxu0 %v1803
        %1877 = vmatprep.subr.bf16.mxu0 %v1807
        %1878 = vmatpush1.bf16.msra.mxu0 %v1806
        %1879 = vmatprep.subr.bf16.mxu0 %v1810
        %1880 = vmatpush1.bf16.msra.mxu0 %v1809
        %1881 = vmatprep.subr.bf16.mxu0 %v1813
        %1882 = vmatpush1.bf16.msra.mxu0 %v1812
        %1883 = vmatprep.subr.bf16.mxu0 %v1816
        %1884 = vmatpush1.bf16.msra.mxu0 %v1815
        %1885 = vmatprep.subr.bf16.mxu0 %v1819
        %1886 = vmatpush1.bf16.msra.mxu0 %v1818
        %1887 = vmatprep.subr.bf16.mxu0 %v1822
        %1888 = vmatpush1.bf16.msra.mxu0 %v1821
        %1889 = vmatprep.subr.bf16.mxu0 %v1825
        %1890 = vmatpush1.bf16.msra.mxu0 %v1824
        %1891 = vmatprep.subr.bf16.mxu0 %v1828
        %1892 = vmatpush1.bf16.msra.mxu0 %v1827
        %1893 = vmatprep.mubr.bf16.mxu0 %v1858
        %1894 = vmatmul.mubr.bf16.gmra.mrb[0].mxu0 %v1851
        %v1895 = vpop.f32.mrb[0].mxu0
        %v1896 = vadd.f32 %v1834, %v1895
        %v1897 = vpop.f32.mrb[0].mxu0
        %v1898 = vadd.f32 %v1834, %v1897
        %v1899 = vpop.f32.mrb[0].mxu0
        %v1900 = vpop.f32.mrb[0].mxu0
        %1901 = vdwg.mxu0
        %1902 = vmatprep.subr.bf16.mxu0 0
        %1903 = vmatpush1.bf16.msra.mxu0 %v1784
        %1904 = vmatprep.subr.bf16.mxu0 0
        %1905 = vmatpush1.bf16.msra.mxu0 %v1787
        %1906 = vmatprep.subr.bf16.mxu0 0
        %1907 = vmatpush1.bf16.msra.mxu0 %v1790
        %1908 = vmatprep.subr.bf16.mxu0 0
        %1909 = vmatpush1.bf16.msra.mxu0 %v1793
        %1910 = vmatprep.subr.bf16.mxu0 0
        %1911 = vmatpush1.bf16.msra.mxu0 %v1796
        %1912 = vmatprep.subr.bf16.mxu0 0
        %1913 = vmatpush1.bf16.msra.mxu0 %v1799
        %1914 = vmatprep.subr.bf16.mxu0 0
        %1915 = vmatpush1.bf16.msra.mxu0 %v1802
        %1916 = vmatprep.subr.bf16.mxu0 0
        %1917 = vmatpush1.bf16.msra.mxu0 %v1805
        %1918 = vmatprep.subr.bf16.mxu0 0
        %1919 = vmatpush1.bf16.msra.mxu0 %v1808
        %1920 = vmatprep.subr.bf16.mxu0 0
        %1921 = vmatpush1.bf16.msra.mxu0 %v1811
        %1922 = vmatprep.subr.bf16.mxu0 0
        %1923 = vmatpush1.bf16.msra.mxu0 %v1814
        %1924 = vmatprep.subr.bf16.mxu0 0
        %1925 = vmatpush1.bf16.msra.mxu0 %v1817
        %1926 = vmatprep.subr.bf16.mxu0 0
        %1927 = vmatpush1.bf16.msra.mxu0 %v1820
        %1928 = vmatprep.subr.bf16.mxu0 0
        %1929 = vmatpush1.bf16.msra.mxu0 %v1823
        %1930 = vmatprep.subr.bf16.mxu0 0
        %1931 = vmatpush1.bf16.msra.mxu0 %v1826
        %1932 = vmatprep.subr.bf16.mxu0 0
        %1933 = vmatpush1.bf16.msra.mxu0 %v1829
        %1934 = vmatprep.mubr.bf16.mxu0 %v1858
        %1935 = vmatmul.mubr.bf16.gmra.mrb[0].mxu0 %v1851
        %v1936 = vpop.f32.mrb[0].mxu0
        %v1937 = vadd.f32 %v1834, %v1936
        %v1938 = vpop.f32.mrb[0].mxu0
        %v1939 = vpop.f32.mrb[0].mxu0
        %v1940 = vpop.f32.mrb[0].mxu0
        %1941 = vdwg.mxu0
        %v1945 = vcombine.low %v1896, %v1898
        %v1947 = vunpack.c.l.s4 1983009808
        %v1948 = vunpack.c.0.s8 %v1947
        %v1949 = vlaneseq
        %v1950 = vshrl.u32 %v1949, 7
        %v1951 = vsub.s32 %v1948, %v1950
        %v1952 = vrot.slane %v1945, %v1951
        %v1954 = vunpack.c.l.s4 1983009808
        %v1955 = vunpack.c.0.s8 %v1954
        %v1956 = vlaneseq
        %v1957 = vshrl.u32 %v1956, 7
        %v1958 = vsub.s32 %v1955, %v1957
        %v1959 = vrot.slane %v1937, %v1958
        %v1960 = vcombine.low %v1952, %v1959
        %1962 = vst [vmem:[%s292] sm:$0x3f] %v1960
        %s1963 = sand.u32 %s170, 1
        %s1964 = scalar_lea.sflag [#allocation6], %s1963
        %s1965 = sand.u32 %s170, 1
        %s1966 = smul.addr %s1965, 6
        %s1967 = scalar_lea.vmem [#allocation7], %s1966
        // Predicated region
        $region45: #{tpu_custom_call.1} parent=39 // pred_check
          %p1968 = pneg %p180
        $region46: #{tpu_custom_call.1} parent=39 // pred_check_branch
          %1970 = sbr.rel (%p1968) target = $region48
        $region47: #{tpu_custom_call.1} parent=39 // pred_region
          %s1971 = smul.u32 3, %s34
          %s1973 = ssub.s32 96, 96
          %1974 = vsyncadd %s1964, %s1973
          %s1975 = smul.addr %s33, 6
          %s1976 = sadd.s32 %s1971, %s1975
          %s1977 = smul.addr %s1976, 32
          %s1978 = scalar_lea.hbm %s6, %s1977
          %s1980 = sshll.u32 %s1967, 4
          %s1981 = int_to_ptr.vmem [resolvable:$true] %s1980
          %1983 = dma.vmem_to_hbm [thread:$0]  %s1981, 96, %s1978, %s1964
        $region48: #{tpu_custom_call.1} parent=39 // pred_fallthru
          _
      $region40: #{tpu_custom_call.1} parent=5 // pred_fallthru
        _
      %p1984 = scmp.le.s32.totalorder 2, %s24
      // Predicated region
      $region49: #{tpu_custom_call.1} parent=5 // pred_check
        %p1985 = pneg %p1984
      $region50: #{tpu_custom_call.1} parent=5 // pred_check_branch
        %1987 = sbr.rel (%p1985) target = $region52
      $region51: #{tpu_custom_call.1} parent=5 // pred_region
        %s1988 = ssub.s32 %s24, 2
        // Predicated region
        $region53: #{tpu_custom_call.1} parent=51 // pred_check
          %p1989 = pneg %p186
        $region54: #{tpu_custom_call.1} parent=51 // pred_check_branch
          %1991 = sbr.rel (%p1989) target = $region56
        $region55: #{tpu_custom_call.1} parent=51 // pred_region
          %s1992 = sand.u32 %s171, 1
          %s1993 = scalar_lea.sflag [#allocation6], %s1992
          %s1994 = sand.u32 %s171, 1
          %s1995 = smul.addr %s1994, 6
          %s1996 = scalar_lea.vmem [#allocation7], %s1995
          %1997 = dma.done %s1993, 96
        $region56: #{tpu_custom_call.1} parent=51 // pred_fallthru
          _
      $region52: #{tpu_custom_call.1} parent=5 // pred_fallthru
        _
    $region6: #{tpu_custom_call.1} parent=1 // loop_footer
      %s28 = sadd.s32 1, %s24
    $region7: #{tpu_custom_call.1} parent=1 // loop_footer_branch
      %23 = sbr.rel target = $region3
    $region8: #{tpu_custom_call.1} parent=1 // loop_exit
      _
    %1998 = vsyncpa [#allocation5], 1
    %s1999 = scalar_lea.sflag [#allocation5], 1
    %2000 = vsyncpa %s1999, 1
    %2001 = vsyncpa [#allocation6], 1
    %s2002 = scalar_lea.sflag [#allocation6], 1
    %2003 = vsyncpa %s2002, 1

</llo_original>
